<compile_context>
chip_gen: v5e
topology: v5e:2x2
jax: 0.10.0
libtpu: 0.0.40
codegen_flags: <defaults>
</compile_context>

<pallas_src>
import functools

import jax
import jax.numpy as jnp
from jax.experimental import pallas as pl
from jax.experimental.pallas import tpu as pltpu

BN_EPS = 1e-5
_MAX_TB = 1024  # max batch-block rows (multiple of 8)


def _round_up(x, m):
    return -(-x // m) * m


# ---------------------------------------------------------------------------
# Parameter init (PyTorch-style Linear init), BatchNorm folded into (W, b),
# and init-time weight concatenation so each layer is ONE wide MXU matmul.
# ---------------------------------------------------------------------------
def _init_linear(key, din, dout):
    kw, kb = jax.random.split(key)
    bound = 1.0 / (din ** 0.5)
    W = jax.random.uniform(kw, (din, dout), jnp.float32, -bound, bound)
    b = jax.random.uniform(kb, (dout,), jnp.float32, -bound, bound)
    return W, b


def _init_linear_bn(key, din, dout):
    """Linear -> BatchNorm1d (eval, default running stats) folded to one affine."""
    W, b = _init_linear(key, din, dout)
    gamma = jnp.ones((dout,), jnp.float32)
    beta = jnp.zeros((dout,), jnp.float32)
    mean = jnp.zeros((dout,), jnp.float32)
    var = jnp.ones((dout,), jnp.float32)
    scale = gamma * jax.lax.rsqrt(var + BN_EPS)
    return W * scale[None, :], (b - mean) * scale + beta


def _concat_cols(cols, n_row_groups, d_in):
    """Column-concatenate ops that read (a slice of) the same lane-dense input.

    cols: list of (row_group, W (d_in, n), b (n,)).  Row group g reads input
    lanes [g*d_in, (g+1)*d_in).  Returns ((n_row_groups*d_in, Ntot) bf16,
    (1, Ntot) f32) so a whole layer of narrow matmuls becomes one wide matmul.
    """
    Ntot = int(sum(W.shape[1] for _, W, _ in cols))
    Wcat = jnp.zeros((n_row_groups * d_in, Ntot), jnp.float32)
    bcat = jnp.zeros((Ntot,), jnp.float32)
    off = 0
    for g, W, b in cols:
        n = W.shape[1]
        Wcat = Wcat.at[g * d_in:(g + 1) * d_in, off:off + n].set(W)
        bcat = bcat.at[off:off + n].set(b)
        off += n
    return Wcat.astype(jnp.bfloat16), bcat[None, :]


def init_cgc_level(key, cur_level, n_level, n_branch, nes, nss, input_dims, expert_dims):
    din = input_dims if cur_level == 1 else expert_dims[-1]
    E = n_branch * nes + nss
    nG = nes + nss
    L = len(expert_dims)
    has_shared_gate = cur_level < n_level
    n_in = 1 if cur_level == 1 else n_branch + 1   # level 1: all branches share x

    k_exp, k_gs, k_gsh = jax.random.split(key, 3)
    exp_keys = jax.random.split(k_exp, E * L)
    gs_keys = jax.random.split(k_gs, n_branch)

    def expert_group(e):
        if n_in == 1:
            return 0
        return e // nes if e < n_branch * nes else n_branch

    # layer 0: all experts + all branch gates (+ shared gate), fused along N
    cols = []
    for e in range(E):
        W, b = _init_linear_bn(exp_keys[e * L + 0], din, expert_dims[0])
        cols.append((expert_group(e), W, b))
    for i in range(n_branch):
        Wg, bg = _init_linear_bn(gs_keys[i], din, nG)
        cols.append((0 if n_in == 1 else i, Wg, bg))
    if has_shared_gate:
        Wsh, bsh = _init_linear_bn(k_gsh, din, E)
        cols.append((0 if n_in == 1 else n_branch, Wsh, bsh))
    W0, b0 = _concat_cols(cols, n_in, din)

    # deeper expert layers: block-diagonal over the E experts (one matmul each)
    Wd, bd = [], []
    for l in range(1, L):
        cols = []
        for e in range(E):
            W, b = _init_linear_bn(exp_keys[e * L + l], expert_dims[l - 1], expert_dims[l])
            cols.append((e, W, b))
        Wl, bl = _concat_cols(cols, E, expert_dims[l - 1])
        Wd.append(Wl)
        bd.append(bl)
    return dict(W0=W0, b0=b0, Wd=Wd, bd=bd)


def init_towers(key, n_branch, din, tower_dims):
    Lt = len(tower_dims)
    keys = jax.random.split(key, n_branch * (Lt + 1))
    Wh, bh = [], []
    for l in range(Lt):
        d_in = din if l == 0 else tower_dims[l - 1]
        cols = []
        for br in range(n_branch):
            W, b = _init_linear_bn(keys[br * (Lt + 1) + l], d_in, tower_dims[l])
            cols.append((br, W, b))
        Wl, bl = _concat_cols(cols, n_branch, d_in)
        Wh.append(Wl)
        bh.append(bl)
    d_last = tower_dims[-1] if Lt > 0 else din
    cols = []
    for br in range(n_branch):
        W, b = _init_linear(keys[br * (Lt + 1) + Lt], d_last, 1)  # plain Linear(d,1)
        cols.append((br, W, b))
    Wo, bo = _concat_cols(cols, n_branch, d_last)   # (n_branch*d_last, n_branch)
    return dict(Wh=Wh, bh=bh, Wo=Wo, bo=bo)


def init_ple(key, vocab_sizes, embed_dims, domain_num, task_num, n_level,
             nes, nss, expert_dims, tower_dims):
    input_dims = sum(embed_dims)
    n_branch = domain_num * task_num
    k_emb, k_cgc, k_tow = jax.random.split(key, 3)
    # TODO(synk): reference EmbeddingLayer class not provided; modelled as one
    # normal(0,1) lookup table per sparse feature (squeeze_dim=True output).
    emb_keys = jax.random.split(k_emb, len(vocab_sizes))
    embed_tables = [jax.random.normal(k, (v, d), jnp.float32)
                    for k, v, d in zip(emb_keys, vocab_sizes, embed_dims)]
    cgc_keys = jax.random.split(k_cgc, n_level)
    levels = [init_cgc_level(cgc_keys[i], i + 1, n_level, n_branch, nes, nss,
                             input_dims, expert_dims) for i in range(n_level)]
    towers = init_towers(k_tow, n_branch, expert_dims[-1], tower_dims)

    # constant 0/1 matrices for the domain-mask scatter:
    #   mask = onehot @ T  (tile the domain one-hot over tasks)
    #   result = (y * mask) @ S  (sum the disjoint masked branches per task)
    T = jnp.zeros((domain_num, n_branch), jnp.float32)
    S = jnp.zeros((n_branch, task_num), jnp.float32)
    for t in range(task_num):
        for d in range(domain_num):
            T = T.at[d, t * domain_num + d].set(1.0)
            S = S.at[t * domain_num + d, t].set(1.0)
    return dict(embed_tables=embed_tables, levels=levels, towers=towers,
                scatter_T=T, scatter_S=S)


# ---------------------------------------------------------------------------
# Fused PLE kernel
# ---------------------------------------------------------------------------
def _softmax_lastdim(z):
    z = z - jnp.max(z, axis=-1, keepdims=True)
    e = jnp.exp(z)
    # approx reciprocal runs on the EUP slot; ~1e-3 relative error is accepted.
    return e * pl.reciprocal(jnp.sum(e, axis=-1, keepdims=True), approx=True)


def _tree_sum(xs):
    xs = list(xs)
    while len(xs) > 1:
        nxt = [xs[i] + xs[i + 1] for i in range(0, len(xs) - 1, 2)]
        if len(xs) & 1:
            nxt.append(xs[-1])
        xs = nxt
    return xs[0]


def _make_ple_kernel(n_level, n_branch, nes, nss, expert_dims, tower_dims):
    E = n_branch * nes + nss
    nG = nes + nss
    L = len(expert_dims)
    Lt = len(tower_dims)
    d_last = expert_dims[-1]

    def kernel(*refs):
        slab_ref = refs[-1]          # VMEM scratch: lane-dense inter-level slab
        out_ref = refs[-2]
        idx = 0
        x_ref = refs[idx]; idx += 1
        oh_ref = refs[idx]; idx += 1
        lvl_refs = []
        for _ in range(n_level):
            W0 = refs[idx]; b0 = refs[idx + 1]; idx += 2
            Wd = refs[idx: idx + (L - 1)]; idx += (L - 1)
            bd = refs[idx: idx + (L - 1)]; idx += (L - 1)
            lvl_refs.append((W0, b0, Wd, bd))
        Wh = refs[idx: idx + Lt]; idx += Lt
        bh = refs[idx: idx + Lt]; idx += Lt
        Wo = refs[idx]; bo = refs[idx + 1]; idx += 2
        T_ref = refs[idx]; S_ref = refs[idx + 1]; idx += 2

        prev_width = 0
        for lvl in range(n_level):
            has_sh = (lvl + 1) < n_level
            W0, b0, Wd, bd = lvl_refs[lvl]
            if lvl == 0:
                h_in = x_ref[...].astype(jnp.bfloat16)                  # (TB, din0)
            else:
                h_in = slab_ref[:, :prev_width].astype(jnp.bfloat16)    # (TB, (nb+1)*d)

            # ONE wide MXU matmul for all experts + all gates of this level.
            z = jnp.dot(h_in, W0[...], preferred_element_type=jnp.float32) + b0[...]

            exp_w = E * expert_dims[0]
            exp_slab = jnp.maximum(z[:, :exp_w], 0.0)                   # ReLU on experts
            off = exp_w
            gates = []
            for i in range(n_branch):
                gates.append(_softmax_lastdim(z[:, off:off + nG]))
                off += nG
            g_sh = _softmax_lastdim(z[:, off:off + E]) if has_sh else None

            # deeper expert layers: one block-diagonal matmul per layer
            for l in range(1, L):
                exp_slab = jnp.maximum(
                    jnp.dot(exp_slab.astype(jnp.bfloat16), Wd[l - 1][...],
                            preferred_element_type=jnp.float32) + bd[l - 1][...], 0.0)

            def ecol(e):
                return exp_slab[:, e * d_last:(e + 1) * d_last]

            # gate-weighted pooling (tree-shaped reduction, lane-contiguous slab)
            outs = []
            for i in range(n_branch):
                sel = ([i * nes + k for k in range(nes)]
                       + [n_branch * nes + k for k in range(nss)])
                outs.append(_tree_sum([gates[i][:, k:k + 1] * ecol(e)
                                       for k, e in enumerate(sel)]))
            if has_sh:
                outs.append(_tree_sum([g_sh[:, e:e + 1] * ecol(e) for e in range(E)]))

            # lane-dense slab for the next level / the towers (stays in VMEM)
            for i, pooled in enumerate(outs):
                slab_ref[:, i * d_last:(i + 1) * d_last] = pooled
            prev_width = len(outs) * d_last

        # towers: block-diagonal matmuls over the lane-concatenated branches
        h = slab_ref[:, :n_branch * d_last].astype(jnp.bfloat16)
        for l in range(Lt):
            h = jnp.maximum(
                jnp.dot(h, Wh[l][...], preferred_element_type=jnp.float32) + bh[l][...],
                0.0).astype(jnp.bfloat16)
        y = jnp.dot(h, Wo[...], preferred_element_type=jnp.float32) + bo[...]
        y = jax.nn.sigmoid(y)                                           # (TB, n_branch)

        # domain scatter: result[:, t] = y[:, t*domain_num + d] where domain == d.
        oh = oh_ref[...]                                                # (TB, D) one-hot
        mask = jnp.dot(oh, T_ref[...], preferred_element_type=jnp.float32)
        out_ref[...] = jnp.dot(y * mask, S_ref[...],
                               preferred_element_type=jnp.float32)      # single store

    return kernel


# ---------------------------------------------------------------------------
# pallas_call wrapper
# ---------------------------------------------------------------------------
def _batch_plan(B, max_tb=_MAX_TB):
    Bp = _round_up(B, 8)
    tb = min(max_tb, Bp)
    # give the grid >= 2 blocks when the batch allows it (v7x has 2 TensorCores)
    if Bp > 8 and Bp // tb < 2:
        tb = _round_up(-(-Bp // 2), 8)
    Bp = _round_up(Bp, tb)
    return tb, Bp, Bp // tb


def ple_forward(x, params, *, domain_num, task_num, n_level, nes, nss,
                expert_dims, tower_dims):
    expert_dims = tuple(expert_dims)
    tower_dims = tuple(tower_dims)
    n_branch = domain_num * task_num

    # x: int32 (num_features + 1, batch); last row is the per-sample domain id.
    domain_id = x[-1, :]
    embed_x = jnp.concatenate(
        [jnp.take(tbl, x[f], axis=0) for f, tbl in enumerate(params["embed_tables"])],
        axis=-1)                                                   # (B, sum(embed_dims))
    onehot = jax.nn.one_hot(domain_id, domain_num, dtype=jnp.float32)

    B, din = embed_x.shape
    tb, Bp, n_blocks = _batch_plan(B)
    if Bp != B:
        embed_x = jnp.pad(embed_x, ((0, Bp - B), (0, 0)))
        onehot = jnp.pad(onehot, ((0, Bp - B), (0, 0)))

    # flat arg list: batch-tiled inputs first, then constant weight blocks
    args = [embed_x, onehot]
    for lv in params["levels"]:
        args += [lv["W0"], lv["b0"]] + list(lv["Wd"]) + list(lv["bd"])
    tw = params["towers"]
    args += list(tw["Wh"]) + list(tw["bh"]) + [tw["Wo"], tw["bo"]]
    args += [params["scatter_T"], params["scatter_S"]]

    in_specs = [pl.BlockSpec((tb, din), lambda b: (b, 0)),
                pl.BlockSpec((tb, domain_num), lambda b: (b, 0))]
    for a in args[2:]:
        # constant-index full blocks: weights are DMA'd once and stay resident.
        # TODO(synk): pipeline_mode=pl.Buffered(1) would single-buffer these on
        # v7x's 64 MiB VMEM; left at the default buffering for portability.
        in_specs.append(pl.BlockSpec(a.shape, lambda b, _nd=a.ndim: (0,) * _nd))

    kernel = _make_ple_kernel(n_level, n_branch, nes, nss, expert_dims, tower_dims)

    # advisory cost estimate + explicit VMEM budget (v7x-safe cap of 64 MiB)
    weight_bytes = sum(int(a.size) * a.dtype.itemsize for a in args[2:])
    flops = sum(2 * Bp * a.shape[0] * a.shape[1]
                for a in args[2:] if a.ndim == 2 and a.shape[0] > 1)
    trans = Bp * (n_level * (n_branch * (nes + nss) + n_branch * nes + nss) + n_branch)
    bytes_accessed = (sum(int(a.size) * a.dtype.itemsize for a in args)
                      + Bp * task_num * 4)
    slab_bytes = tb * (n_branch + 1) * expert_dims[-1] * 4
    tile_bytes = tb * (din * 4 + domain_num * 4 + task_num * 4)
    vmem_limit = int(max(32 << 20,
                         min(64 << 20,
                             2 * weight_bytes + 2 * tile_bytes + 2 * slab_bytes
                             + (8 << 20))))

    out = pl.pallas_call(
        kernel,
        out_shape=jax.ShapeDtypeStruct((Bp, task_num), jnp.float32),
        grid=(n_blocks,),
        in_specs=in_specs,
        out_specs=pl.BlockSpec((tb, task_num), lambda b: (b, 0)),
        scratch_shapes=[pltpu.VMEM((tb, (n_branch + 1) * expert_dims[-1]), jnp.float32)],
        compiler_params=pltpu.CompilerParams(
            dimension_semantics=("parallel",),
            vmem_limit_bytes=vmem_limit),
        cost_estimate=pl.CostEstimate(flops=int(flops), transcendentals=int(trans),
                                      bytes_accessed=int(bytes_accessed)),
    )(*args)
    return out[:B]


if __name__ == "__main__":
    key = jax.random.PRNGKey(0)

    batch = 8
    vocab_sizes = [10, 10, 10, 10]
    embed_dims = [8, 8, 8, 8]          # input_dims = 32
    domain_num, task_num = 2, 2        # 4 branches
    n_level = 2
    n_expert_specific, n_expert_shared = 2, 1
    expert_dims = [16]
    tower_dims = [8]

    k_param, k_x, k_d = jax.random.split(key, 3)
    params = init_ple(k_param, vocab_sizes, embed_dims, domain_num, task_num,
                      n_level, n_expert_specific, n_expert_shared,
                      expert_dims, tower_dims)

    feat_idx = jax.random.randint(k_x, (len(vocab_sizes), batch), 0, 10, jnp.int32)
    dom = jax.random.randint(k_d, (1, batch), 0, domain_num, jnp.int32)
    x = jnp.concatenate([feat_idx, dom], axis=0)   # (num_features + 1, batch)

    fwd = jax.jit(functools.partial(
        ple_forward, domain_num=domain_num, task_num=task_num,
        n_level=n_level, nes=n_expert_specific, nss=n_expert_shared,
        expert_dims=tuple(expert_dims), tower_dims=tuple(tower_dims)))

    out = fwd(x, params)
    out = jax.block_until_ready(out)
    assert out.shape == (batch, task_num)
    assert bool(jnp.all(jnp.isfinite(out)))
    print("KERNEL_OK")
</pallas_src>

<mosaic_0001>
module attributes {stable_mosaic.version = 11 : i64} {
  func.func @kernel(%arg0: i32, %arg1: memref<8x32xf32, #tpu.memory_space<vmem>>, %arg2: memref<8x2xf32, #tpu.memory_space<vmem>>, %arg3: memref<32x165xbf16, #tpu.memory_space<vmem>>, %arg4: memref<1x165xf32, #tpu.memory_space<vmem>>, %arg5: memref<80x156xbf16, #tpu.memory_space<vmem>>, %arg6: memref<1x156xf32, #tpu.memory_space<vmem>>, %arg7: memref<64x32xbf16, #tpu.memory_space<vmem>>, %arg8: memref<1x32xf32, #tpu.memory_space<vmem>>, %arg9: memref<32x4xbf16, #tpu.memory_space<vmem>>, %arg10: memref<1x4xf32, #tpu.memory_space<vmem>>, %arg11: memref<2x4xf32, #tpu.memory_space<vmem>>, %arg12: memref<4x2xf32, #tpu.memory_space<vmem>>, %arg13: memref<8x2xf32, #tpu.memory_space<vmem>>, %arg14: memref<8x80xf32, #tpu.memory_space<vmem>>) attributes {dimension_semantics = [#tpu.dimension_semantics<parallel>], iteration_bounds = array<i64: 1>, scalar_prefetch = 0 : i64, scratch_operands = 1 : i64, tpu.core_type = #tpu.core_type<tc>, window_params = [{transform_indices = @transform_0, window_bounds = array<i64: 8, 32>}, {transform_indices = @transform_1, window_bounds = array<i64: 8, 2>}, {pipeline_mode = #tpu.pipeline_mode<synchronous>, transform_indices = @transform_2, window_bounds = array<i64: 32, 165>}, {pipeline_mode = #tpu.pipeline_mode<synchronous>, transform_indices = @transform_3, window_bounds = array<i64: 1, 165>}, {pipeline_mode = #tpu.pipeline_mode<synchronous>, transform_indices = @transform_4, window_bounds = array<i64: 80, 156>}, {pipeline_mode = #tpu.pipeline_mode<synchronous>, transform_indices = @transform_5, window_bounds = array<i64: 1, 156>}, {pipeline_mode = #tpu.pipeline_mode<synchronous>, transform_indices = @transform_6, window_bounds = array<i64: 64, 32>}, {pipeline_mode = #tpu.pipeline_mode<synchronous>, transform_indices = @transform_7, window_bounds = array<i64: 1, 32>}, {pipeline_mode = #tpu.pipeline_mode<synchronous>, transform_indices = @transform_8, window_bounds = array<i64: 32, 4>}, {pipeline_mode = #tpu.pipeline_mode<synchronous>, transform_indices = @transform_9, window_bounds = array<i64: 1, 4>}, {pipeline_mode = #tpu.pipeline_mode<synchronous>, transform_indices = @transform_10, window_bounds = array<i64: 2, 4>}, {pipeline_mode = #tpu.pipeline_mode<synchronous>, transform_indices = @transform_11, window_bounds = array<i64: 4, 2>}, {transform_indices = @transform_12, window_bounds = array<i64: 8, 2>}]} {
    %c0 = arith.constant 0 : index
    %c0_0 = arith.constant 0 : index
    %0 = vector.load %arg1[%c0, %c0_0] : memref<8x32xf32, #tpu.memory_space<vmem>>, vector<8x32xf32>
    %1 = arith.truncf %0 : vector<8x32xf32> to vector<8x32xbf16>
    %c0_1 = arith.constant 0 : index
    %c0_2 = arith.constant 0 : index
    %2 = vector.load %arg3[%c0_1, %c0_2] : memref<32x165xbf16, #tpu.memory_space<vmem>>, vector<32x165xbf16>
    %cst = arith.constant dense<0.000000e+00> : vector<8x165xf32>
    %3 = tpu.matmul %1, %2, %cst {dimension_numbers = #tpu.dot_dimension_numbers<[1], [0], [0], [1], [0, 0, 1, 1], [], []>} : vector<8x32xbf16>, vector<32x165xbf16>, vector<8x165xf32> -> vector<8x165xf32>
    %c0_3 = arith.constant 0 : index
    %c0_4 = arith.constant 0 : index
    %4 = vector.load %arg4[%c0_3, %c0_4] : memref<1x165xf32, #tpu.memory_space<vmem>>, vector<1x165xf32>
    %5 = vector.broadcast %4 : vector<1x165xf32> to vector<8x165xf32>
    %6 = arith.addf %3, %5 : vector<8x165xf32>
    %7 = vector.extract_strided_slice %6 {offsets = [0, 0], sizes = [8, 144], strides = [1, 1]} : vector<8x165xf32> to vector<8x144xf32>
    %cst_5 = arith.constant 0.000000e+00 : f32
    %8 = vector.broadcast %cst_5 : f32 to vector<8x144xf32>
    %9 = arith.maximumf %7, %8 : vector<8x144xf32>
    %10 = vector.extract_strided_slice %6 {offsets = [0, 144], sizes = [8, 3], strides = [1, 1]} : vector<8x165xf32> to vector<8x3xf32>
    %cst_6 = arith.constant dense<0xFF800000> : vector<8xf32>
    %11 = vector.multi_reduction <maximumf>, %10, %cst_6 [1] : vector<8x3xf32> to vector<8xf32>
    %12 = vector.shape_cast %11 : vector<8xf32> to vector<8x1xf32>
    %13 = vector.broadcast %12 : vector<8x1xf32> to vector<8x3xf32>
    %14 = arith.subf %10, %13 : vector<8x3xf32>
    %15 = math.exp %14 : vector<8x3xf32>
    %cst_7 = arith.constant dense<0.000000e+00> : vector<8xf32>
    %16 = vector.multi_reduction <add>, %15, %cst_7 [1] : vector<8x3xf32> to vector<8xf32>
    %17 = vector.shape_cast %16 : vector<8xf32> to vector<8x1xf32>
    %18 = tpu.reciprocal %17 {approx = true} : vector<8x1xf32> -> vector<8x1xf32>
    %19 = vector.broadcast %18 : vector<8x1xf32> to vector<8x3xf32>
    %20 = arith.mulf %15, %19 : vector<8x3xf32>
    %21 = vector.extract_strided_slice %6 {offsets = [0, 147], sizes = [8, 3], strides = [1, 1]} : vector<8x165xf32> to vector<8x3xf32>
    %cst_8 = arith.constant dense<0xFF800000> : vector<8xf32>
    %22 = vector.multi_reduction <maximumf>, %21, %cst_8 [1] : vector<8x3xf32> to vector<8xf32>
    %23 = vector.shape_cast %22 : vector<8xf32> to vector<8x1xf32>
    %24 = vector.broadcast %23 : vector<8x1xf32> to vector<8x3xf32>
    %25 = arith.subf %21, %24 : vector<8x3xf32>
    %26 = math.exp %25 : vector<8x3xf32>
    %cst_9 = arith.constant dense<0.000000e+00> : vector<8xf32>
    %27 = vector.multi_reduction <add>, %26, %cst_9 [1] : vector<8x3xf32> to vector<8xf32>
    %28 = vector.shape_cast %27 : vector<8xf32> to vector<8x1xf32>
    %29 = tpu.reciprocal %28 {approx = true} : vector<8x1xf32> -> vector<8x1xf32>
    %30 = vector.broadcast %29 : vector<8x1xf32> to vector<8x3xf32>
    %31 = arith.mulf %26, %30 : vector<8x3xf32>
    %32 = vector.extract_strided_slice %6 {offsets = [0, 150], sizes = [8, 3], strides = [1, 1]} : vector<8x165xf32> to vector<8x3xf32>
    %cst_10 = arith.constant dense<0xFF800000> : vector<8xf32>
    %33 = vector.multi_reduction <maximumf>, %32, %cst_10 [1] : vector<8x3xf32> to vector<8xf32>
    %34 = vector.shape_cast %33 : vector<8xf32> to vector<8x1xf32>
    %35 = vector.broadcast %34 : vector<8x1xf32> to vector<8x3xf32>
    %36 = arith.subf %32, %35 : vector<8x3xf32>
    %37 = math.exp %36 : vector<8x3xf32>
    %cst_11 = arith.constant dense<0.000000e+00> : vector<8xf32>
    %38 = vector.multi_reduction <add>, %37, %cst_11 [1] : vector<8x3xf32> to vector<8xf32>
    %39 = vector.shape_cast %38 : vector<8xf32> to vector<8x1xf32>
    %40 = tpu.reciprocal %39 {approx = true} : vector<8x1xf32> -> vector<8x1xf32>
    %41 = vector.broadcast %40 : vector<8x1xf32> to vector<8x3xf32>
    %42 = arith.mulf %37, %41 : vector<8x3xf32>
    %43 = vector.extract_strided_slice %6 {offsets = [0, 153], sizes = [8, 3], strides = [1, 1]} : vector<8x165xf32> to vector<8x3xf32>
    %cst_12 = arith.constant dense<0xFF800000> : vector<8xf32>
    %44 = vector.multi_reduction <maximumf>, %43, %cst_12 [1] : vector<8x3xf32> to vector<8xf32>
    %45 = vector.shape_cast %44 : vector<8xf32> to vector<8x1xf32>
    %46 = vector.broadcast %45 : vector<8x1xf32> to vector<8x3xf32>
    %47 = arith.subf %43, %46 : vector<8x3xf32>
    %48 = math.exp %47 : vector<8x3xf32>
    %cst_13 = arith.constant dense<0.000000e+00> : vector<8xf32>
    %49 = vector.multi_reduction <add>, %48, %cst_13 [1] : vector<8x3xf32> to vector<8xf32>
    %50 = vector.shape_cast %49 : vector<8xf32> to vector<8x1xf32>
    %51 = tpu.reciprocal %50 {approx = true} : vector<8x1xf32> -> vector<8x1xf32>
    %52 = vector.broadcast %51 : vector<8x1xf32> to vector<8x3xf32>
    %53 = arith.mulf %48, %52 : vector<8x3xf32>
    %54 = vector.extract_strided_slice %6 {offsets = [0, 156], sizes = [8, 9], strides = [1, 1]} : vector<8x165xf32> to vector<8x9xf32>
    %cst_14 = arith.constant dense<0xFF800000> : vector<8xf32>
    %55 = vector.multi_reduction <maximumf>, %54, %cst_14 [1] : vector<8x9xf32> to vector<8xf32>
    %56 = vector.shape_cast %55 : vector<8xf32> to vector<8x1xf32>
    %57 = vector.broadcast %56 : vector<8x1xf32> to vector<8x9xf32>
    %58 = arith.subf %54, %57 : vector<8x9xf32>
    %59 = math.exp %58 : vector<8x9xf32>
    %cst_15 = arith.constant dense<0.000000e+00> : vector<8xf32>
    %60 = vector.multi_reduction <add>, %59, %cst_15 [1] : vector<8x9xf32> to vector<8xf32>
    %61 = vector.shape_cast %60 : vector<8xf32> to vector<8x1xf32>
    %62 = tpu.reciprocal %61 {approx = true} : vector<8x1xf32> -> vector<8x1xf32>
    %63 = vector.broadcast %62 : vector<8x1xf32> to vector<8x9xf32>
    %64 = arith.mulf %59, %63 : vector<8x9xf32>
    %65 = vector.extract_strided_slice %20 {offsets = [0, 0], sizes = [8, 1], strides = [1, 1]} : vector<8x3xf32> to vector<8x1xf32>
    %66 = vector.extract_strided_slice %9 {offsets = [0, 0], sizes = [8, 16], strides = [1, 1]} : vector<8x144xf32> to vector<8x16xf32>
    %67 = vector.broadcast %65 : vector<8x1xf32> to vector<8x16xf32>
    %68 = arith.mulf %67, %66 : vector<8x16xf32>
    %69 = vector.extract_strided_slice %20 {offsets = [0, 1], sizes = [8, 1], strides = [1, 1]} : vector<8x3xf32> to vector<8x1xf32>
    %70 = vector.extract_strided_slice %9 {offsets = [0, 16], sizes = [8, 16], strides = [1, 1]} : vector<8x144xf32> to vector<8x16xf32>
    %71 = vector.broadcast %69 : vector<8x1xf32> to vector<8x16xf32>
    %72 = arith.mulf %71, %70 : vector<8x16xf32>
    %73 = vector.extract_strided_slice %20 {offsets = [0, 2], sizes = [8, 1], strides = [1, 1]} : vector<8x3xf32> to vector<8x1xf32>
    %74 = vector.extract_strided_slice %9 {offsets = [0, 128], sizes = [8, 16], strides = [1, 1]} : vector<8x144xf32> to vector<8x16xf32>
    %75 = vector.broadcast %73 : vector<8x1xf32> to vector<8x16xf32>
    %76 = arith.mulf %75, %74 : vector<8x16xf32>
    %77 = arith.addf %68, %72 : vector<8x16xf32>
    %78 = arith.addf %77, %76 : vector<8x16xf32>
    %79 = vector.extract_strided_slice %31 {offsets = [0, 0], sizes = [8, 1], strides = [1, 1]} : vector<8x3xf32> to vector<8x1xf32>
    %80 = vector.extract_strided_slice %9 {offsets = [0, 32], sizes = [8, 16], strides = [1, 1]} : vector<8x144xf32> to vector<8x16xf32>
    %81 = vector.broadcast %79 : vector<8x1xf32> to vector<8x16xf32>
    %82 = arith.mulf %81, %80 : vector<8x16xf32>
    %83 = vector.extract_strided_slice %31 {offsets = [0, 1], sizes = [8, 1], strides = [1, 1]} : vector<8x3xf32> to vector<8x1xf32>
    %84 = vector.extract_strided_slice %9 {offsets = [0, 48], sizes = [8, 16], strides = [1, 1]} : vector<8x144xf32> to vector<8x16xf32>
    %85 = vector.broadcast %83 : vector<8x1xf32> to vector<8x16xf32>
    %86 = arith.mulf %85, %84 : vector<8x16xf32>
    %87 = vector.extract_strided_slice %31 {offsets = [0, 2], sizes = [8, 1], strides = [1, 1]} : vector<8x3xf32> to vector<8x1xf32>
    %88 = vector.extract_strided_slice %9 {offsets = [0, 128], sizes = [8, 16], strides = [1, 1]} : vector<8x144xf32> to vector<8x16xf32>
    %89 = vector.broadcast %87 : vector<8x1xf32> to vector<8x16xf32>
    %90 = arith.mulf %89, %88 : vector<8x16xf32>
    %91 = arith.addf %82, %86 : vector<8x16xf32>
    %92 = arith.addf %91, %90 : vector<8x16xf32>
    %93 = vector.extract_strided_slice %42 {offsets = [0, 0], sizes = [8, 1], strides = [1, 1]} : vector<8x3xf32> to vector<8x1xf32>
    %94 = vector.extract_strided_slice %9 {offsets = [0, 64], sizes = [8, 16], strides = [1, 1]} : vector<8x144xf32> to vector<8x16xf32>
    %95 = vector.broadcast %93 : vector<8x1xf32> to vector<8x16xf32>
    %96 = arith.mulf %95, %94 : vector<8x16xf32>
    %97 = vector.extract_strided_slice %42 {offsets = [0, 1], sizes = [8, 1], strides = [1, 1]} : vector<8x3xf32> to vector<8x1xf32>
    %98 = vector.extract_strided_slice %9 {offsets = [0, 80], sizes = [8, 16], strides = [1, 1]} : vector<8x144xf32> to vector<8x16xf32>
    %99 = vector.broadcast %97 : vector<8x1xf32> to vector<8x16xf32>
    %100 = arith.mulf %99, %98 : vector<8x16xf32>
    %101 = vector.extract_strided_slice %42 {offsets = [0, 2], sizes = [8, 1], strides = [1, 1]} : vector<8x3xf32> to vector<8x1xf32>
    %102 = vector.extract_strided_slice %9 {offsets = [0, 128], sizes = [8, 16], strides = [1, 1]} : vector<8x144xf32> to vector<8x16xf32>
    %103 = vector.broadcast %101 : vector<8x1xf32> to vector<8x16xf32>
    %104 = arith.mulf %103, %102 : vector<8x16xf32>
    %105 = arith.addf %96, %100 : vector<8x16xf32>
    %106 = arith.addf %105, %104 : vector<8x16xf32>
    %107 = vector.extract_strided_slice %53 {offsets = [0, 0], sizes = [8, 1], strides = [1, 1]} : vector<8x3xf32> to vector<8x1xf32>
    %108 = vector.extract_strided_slice %9 {offsets = [0, 96], sizes = [8, 16], strides = [1, 1]} : vector<8x144xf32> to vector<8x16xf32>
    %109 = vector.broadcast %107 : vector<8x1xf32> to vector<8x16xf32>
    %110 = arith.mulf %109, %108 : vector<8x16xf32>
    %111 = vector.extract_strided_slice %53 {offsets = [0, 1], sizes = [8, 1], strides = [1, 1]} : vector<8x3xf32> to vector<8x1xf32>
    %112 = vector.extract_strided_slice %9 {offsets = [0, 112], sizes = [8, 16], strides = [1, 1]} : vector<8x144xf32> to vector<8x16xf32>
    %113 = vector.broadcast %111 : vector<8x1xf32> to vector<8x16xf32>
    %114 = arith.mulf %113, %112 : vector<8x16xf32>
    %115 = vector.extract_strided_slice %53 {offsets = [0, 2], sizes = [8, 1], strides = [1, 1]} : vector<8x3xf32> to vector<8x1xf32>
    %116 = vector.extract_strided_slice %9 {offsets = [0, 128], sizes = [8, 16], strides = [1, 1]} : vector<8x144xf32> to vector<8x16xf32>
    %117 = vector.broadcast %115 : vector<8x1xf32> to vector<8x16xf32>
    %118 = arith.mulf %117, %116 : vector<8x16xf32>
    %119 = arith.addf %110, %114 : vector<8x16xf32>
    %120 = arith.addf %119, %118 : vector<8x16xf32>
    %121 = vector.extract_strided_slice %64 {offsets = [0, 0], sizes = [8, 1], strides = [1, 1]} : vector<8x9xf32> to vector<8x1xf32>
    %122 = vector.extract_strided_slice %9 {offsets = [0, 0], sizes = [8, 16], strides = [1, 1]} : vector<8x144xf32> to vector<8x16xf32>
    %123 = vector.broadcast %121 : vector<8x1xf32> to vector<8x16xf32>
    %124 = arith.mulf %123, %122 : vector<8x16xf32>
    %125 = vector.extract_strided_slice %64 {offsets = [0, 1], sizes = [8, 1], strides = [1, 1]} : vector<8x9xf32> to vector<8x1xf32>
    %126 = vector.extract_strided_slice %9 {offsets = [0, 16], sizes = [8, 16], strides = [1, 1]} : vector<8x144xf32> to vector<8x16xf32>
    %127 = vector.broadcast %125 : vector<8x1xf32> to vector<8x16xf32>
    %128 = arith.mulf %127, %126 : vector<8x16xf32>
    %129 = vector.extract_strided_slice %64 {offsets = [0, 2], sizes = [8, 1], strides = [1, 1]} : vector<8x9xf32> to vector<8x1xf32>
    %130 = vector.extract_strided_slice %9 {offsets = [0, 32], sizes = [8, 16], strides = [1, 1]} : vector<8x144xf32> to vector<8x16xf32>
    %131 = vector.broadcast %129 : vector<8x1xf32> to vector<8x16xf32>
    %132 = arith.mulf %131, %130 : vector<8x16xf32>
    %133 = vector.extract_strided_slice %64 {offsets = [0, 3], sizes = [8, 1], strides = [1, 1]} : vector<8x9xf32> to vector<8x1xf32>
    %134 = vector.extract_strided_slice %9 {offsets = [0, 48], sizes = [8, 16], strides = [1, 1]} : vector<8x144xf32> to vector<8x16xf32>
    %135 = vector.broadcast %133 : vector<8x1xf32> to vector<8x16xf32>
    %136 = arith.mulf %135, %134 : vector<8x16xf32>
    %137 = vector.extract_strided_slice %64 {offsets = [0, 4], sizes = [8, 1], strides = [1, 1]} : vector<8x9xf32> to vector<8x1xf32>
    %138 = vector.extract_strided_slice %9 {offsets = [0, 64], sizes = [8, 16], strides = [1, 1]} : vector<8x144xf32> to vector<8x16xf32>
    %139 = vector.broadcast %137 : vector<8x1xf32> to vector<8x16xf32>
    %140 = arith.mulf %139, %138 : vector<8x16xf32>
    %141 = vector.extract_strided_slice %64 {offsets = [0, 5], sizes = [8, 1], strides = [1, 1]} : vector<8x9xf32> to vector<8x1xf32>
    %142 = vector.extract_strided_slice %9 {offsets = [0, 80], sizes = [8, 16], strides = [1, 1]} : vector<8x144xf32> to vector<8x16xf32>
    %143 = vector.broadcast %141 : vector<8x1xf32> to vector<8x16xf32>
    %144 = arith.mulf %143, %142 : vector<8x16xf32>
    %145 = vector.extract_strided_slice %64 {offsets = [0, 6], sizes = [8, 1], strides = [1, 1]} : vector<8x9xf32> to vector<8x1xf32>
    %146 = vector.extract_strided_slice %9 {offsets = [0, 96], sizes = [8, 16], strides = [1, 1]} : vector<8x144xf32> to vector<8x16xf32>
    %147 = vector.broadcast %145 : vector<8x1xf32> to vector<8x16xf32>
    %148 = arith.mulf %147, %146 : vector<8x16xf32>
    %149 = vector.extract_strided_slice %64 {offsets = [0, 7], sizes = [8, 1], strides = [1, 1]} : vector<8x9xf32> to vector<8x1xf32>
    %150 = vector.extract_strided_slice %9 {offsets = [0, 112], sizes = [8, 16], strides = [1, 1]} : vector<8x144xf32> to vector<8x16xf32>
    %151 = vector.broadcast %149 : vector<8x1xf32> to vector<8x16xf32>
    %152 = arith.mulf %151, %150 : vector<8x16xf32>
    %153 = vector.extract_strided_slice %64 {offsets = [0, 8], sizes = [8, 1], strides = [1, 1]} : vector<8x9xf32> to vector<8x1xf32>
    %154 = vector.extract_strided_slice %9 {offsets = [0, 128], sizes = [8, 16], strides = [1, 1]} : vector<8x144xf32> to vector<8x16xf32>
    %155 = vector.broadcast %153 : vector<8x1xf32> to vector<8x16xf32>
    %156 = arith.mulf %155, %154 : vector<8x16xf32>
    %157 = arith.addf %124, %128 : vector<8x16xf32>
    %158 = arith.addf %132, %136 : vector<8x16xf32>
    %159 = arith.addf %140, %144 : vector<8x16xf32>
    %160 = arith.addf %148, %152 : vector<8x16xf32>
    %161 = arith.addf %157, %158 : vector<8x16xf32>
    %162 = arith.addf %159, %160 : vector<8x16xf32>
    %163 = arith.addf %161, %162 : vector<8x16xf32>
    %164 = arith.addf %163, %156 : vector<8x16xf32>
    %c0_16 = arith.constant 0 : index
    %c0_17 = arith.constant 0 : index
    %165 = vector.load %arg14[%c0_16, %c0_17] : memref<8x80xf32, #tpu.memory_space<vmem>>, vector<8x16xf32>
    tpu.vector_store %arg14[%c0_16, %c0_17], %78 {strides = array<i32>} : memref<8x80xf32, #tpu.memory_space<vmem>>, vector<8x16xf32>,
    %c0_18 = arith.constant 0 : index
    %c16 = arith.constant 16 : index
    %166 = vector.load %arg14[%c0_18, %c16] : memref<8x80xf32, #tpu.memory_space<vmem>>, vector<8x16xf32>
    tpu.vector_store %arg14[%c0_18, %c16], %92 {strides = array<i32>} : memref<8x80xf32, #tpu.memory_space<vmem>>, vector<8x16xf32>,
    %c0_19 = arith.constant 0 : index
    %c32 = arith.constant 32 : index
    %167 = vector.load %arg14[%c0_19, %c32] : memref<8x80xf32, #tpu.memory_space<vmem>>, vector<8x16xf32>
    tpu.vector_store %arg14[%c0_19, %c32], %106 {strides = array<i32>} : memref<8x80xf32, #tpu.memory_space<vmem>>, vector<8x16xf32>,
    %c0_20 = arith.constant 0 : index
    %c48 = arith.constant 48 : index
    %168 = vector.load %arg14[%c0_20, %c48] : memref<8x80xf32, #tpu.memory_space<vmem>>, vector<8x16xf32>
    tpu.vector_store %arg14[%c0_20, %c48], %120 {strides = array<i32>} : memref<8x80xf32, #tpu.memory_space<vmem>>, vector<8x16xf32>,
    %c0_21 = arith.constant 0 : index
    %c64 = arith.constant 64 : index
    %169 = vector.load %arg14[%c0_21, %c64] : memref<8x80xf32, #tpu.memory_space<vmem>>, vector<8x16xf32>
    tpu.vector_store %arg14[%c0_21, %c64], %164 {strides = array<i32>} : memref<8x80xf32, #tpu.memory_space<vmem>>, vector<8x16xf32>,
    %c0_22 = arith.constant 0 : index
    %c0_23 = arith.constant 0 : index
    %170 = vector.load %arg14[%c0_22, %c0_23] : memref<8x80xf32, #tpu.memory_space<vmem>>, vector<8x80xf32>
    %171 = arith.truncf %170 : vector<8x80xf32> to vector<8x80xbf16>
    %c0_24 = arith.constant 0 : index
    %c0_25 = arith.constant 0 : index
    %172 = vector.load %arg5[%c0_24, %c0_25] : memref<80x156xbf16, #tpu.memory_space<vmem>>, vector<80x156xbf16>
    %cst_26 = arith.constant dense<0.000000e+00> : vector<8x156xf32>
    %173 = tpu.matmul %171, %172, %cst_26 {dimension_numbers = #tpu.dot_dimension_numbers<[1], [0], [0], [1], [0, 0, 1, 1], [], []>} : vector<8x80xbf16>, vector<80x156xbf16>, vector<8x156xf32> -> vector<8x156xf32>
    %c0_27 = arith.constant 0 : index
    %c0_28 = arith.constant 0 : index
    %174 = vector.load %arg6[%c0_27, %c0_28] : memref<1x156xf32, #tpu.memory_space<vmem>>, vector<1x156xf32>
    %175 = vector.broadcast %174 : vector<1x156xf32> to vector<8x156xf32>
    %176 = arith.addf %173, %175 : vector<8x156xf32>
    %177 = vector.extract_strided_slice %176 {offsets = [0, 0], sizes = [8, 144], strides = [1, 1]} : vector<8x156xf32> to vector<8x144xf32>
    %cst_29 = arith.constant 0.000000e+00 : f32
    %178 = vector.broadcast %cst_29 : f32 to vector<8x144xf32>
    %179 = arith.maximumf %177, %178 : vector<8x144xf32>
    %180 = vector.extract_strided_slice %176 {offsets = [0, 144], sizes = [8, 3], strides = [1, 1]} : vector<8x156xf32> to vector<8x3xf32>
    %cst_30 = arith.constant dense<0xFF800000> : vector<8xf32>
    %181 = vector.multi_reduction <maximumf>, %180, %cst_30 [1] : vector<8x3xf32> to vector<8xf32>
    %182 = vector.shape_cast %181 : vector<8xf32> to vector<8x1xf32>
    %183 = vector.broadcast %182 : vector<8x1xf32> to vector<8x3xf32>
    %184 = arith.subf %180, %183 : vector<8x3xf32>
    %185 = math.exp %184 : vector<8x3xf32>
    %cst_31 = arith.constant dense<0.000000e+00> : vector<8xf32>
    %186 = vector.multi_reduction <add>, %185, %cst_31 [1] : vector<8x3xf32> to vector<8xf32>
    %187 = vector.shape_cast %186 : vector<8xf32> to vector<8x1xf32>
    %188 = tpu.reciprocal %187 {approx = true} : vector<8x1xf32> -> vector<8x1xf32>
    %189 = vector.broadcast %188 : vector<8x1xf32> to vector<8x3xf32>
    %190 = arith.mulf %185, %189 : vector<8x3xf32>
    %191 = vector.extract_strided_slice %176 {offsets = [0, 147], sizes = [8, 3], strides = [1, 1]} : vector<8x156xf32> to vector<8x3xf32>
    %cst_32 = arith.constant dense<0xFF800000> : vector<8xf32>
    %192 = vector.multi_reduction <maximumf>, %191, %cst_32 [1] : vector<8x3xf32> to vector<8xf32>
    %193 = vector.shape_cast %192 : vector<8xf32> to vector<8x1xf32>
    %194 = vector.broadcast %193 : vector<8x1xf32> to vector<8x3xf32>
    %195 = arith.subf %191, %194 : vector<8x3xf32>
    %196 = math.exp %195 : vector<8x3xf32>
    %cst_33 = arith.constant dense<0.000000e+00> : vector<8xf32>
    %197 = vector.multi_reduction <add>, %196, %cst_33 [1] : vector<8x3xf32> to vector<8xf32>
    %198 = vector.shape_cast %197 : vector<8xf32> to vector<8x1xf32>
    %199 = tpu.reciprocal %198 {approx = true} : vector<8x1xf32> -> vector<8x1xf32>
    %200 = vector.broadcast %199 : vector<8x1xf32> to vector<8x3xf32>
    %201 = arith.mulf %196, %200 : vector<8x3xf32>
    %202 = vector.extract_strided_slice %176 {offsets = [0, 150], sizes = [8, 3], strides = [1, 1]} : vector<8x156xf32> to vector<8x3xf32>
    %cst_34 = arith.constant dense<0xFF800000> : vector<8xf32>
    %203 = vector.multi_reduction <maximumf>, %202, %cst_34 [1] : vector<8x3xf32> to vector<8xf32>
    %204 = vector.shape_cast %203 : vector<8xf32> to vector<8x1xf32>
    %205 = vector.broadcast %204 : vector<8x1xf32> to vector<8x3xf32>
    %206 = arith.subf %202, %205 : vector<8x3xf32>
    %207 = math.exp %206 : vector<8x3xf32>
    %cst_35 = arith.constant dense<0.000000e+00> : vector<8xf32>
    %208 = vector.multi_reduction <add>, %207, %cst_35 [1] : vector<8x3xf32> to vector<8xf32>
    %209 = vector.shape_cast %208 : vector<8xf32> to vector<8x1xf32>
    %210 = tpu.reciprocal %209 {approx = true} : vector<8x1xf32> -> vector<8x1xf32>
    %211 = vector.broadcast %210 : vector<8x1xf32> to vector<8x3xf32>
    %212 = arith.mulf %207, %211 : vector<8x3xf32>
    %213 = vector.extract_strided_slice %176 {offsets = [0, 153], sizes = [8, 3], strides = [1, 1]} : vector<8x156xf32> to vector<8x3xf32>
    %cst_36 = arith.constant dense<0xFF800000> : vector<8xf32>
    %214 = vector.multi_reduction <maximumf>, %213, %cst_36 [1] : vector<8x3xf32> to vector<8xf32>
    %215 = vector.shape_cast %214 : vector<8xf32> to vector<8x1xf32>
    %216 = vector.broadcast %215 : vector<8x1xf32> to vector<8x3xf32>
    %217 = arith.subf %213, %216 : vector<8x3xf32>
    %218 = math.exp %217 : vector<8x3xf32>
    %cst_37 = arith.constant dense<0.000000e+00> : vector<8xf32>
    %219 = vector.multi_reduction <add>, %218, %cst_37 [1] : vector<8x3xf32> to vector<8xf32>
    %220 = vector.shape_cast %219 : vector<8xf32> to vector<8x1xf32>
    %221 = tpu.reciprocal %220 {approx = true} : vector<8x1xf32> -> vector<8x1xf32>
    %222 = vector.broadcast %221 : vector<8x1xf32> to vector<8x3xf32>
    %223 = arith.mulf %218, %222 : vector<8x3xf32>
    %224 = vector.extract_strided_slice %190 {offsets = [0, 0], sizes = [8, 1], strides = [1, 1]} : vector<8x3xf32> to vector<8x1xf32>
    %225 = vector.extract_strided_slice %179 {offsets = [0, 0], sizes = [8, 16], strides = [1, 1]} : vector<8x144xf32> to vector<8x16xf32>
    %226 = vector.broadcast %224 : vector<8x1xf32> to vector<8x16xf32>
    %227 = arith.mulf %226, %225 : vector<8x16xf32>
    %228 = vector.extract_strided_slice %190 {offsets = [0, 1], sizes = [8, 1], strides = [1, 1]} : vector<8x3xf32> to vector<8x1xf32>
    %229 = vector.extract_strided_slice %179 {offsets = [0, 16], sizes = [8, 16], strides = [1, 1]} : vector<8x144xf32> to vector<8x16xf32>
    %230 = vector.broadcast %228 : vector<8x1xf32> to vector<8x16xf32>
    %231 = arith.mulf %230, %229 : vector<8x16xf32>
    %232 = vector.extract_strided_slice %190 {offsets = [0, 2], sizes = [8, 1], strides = [1, 1]} : vector<8x3xf32> to vector<8x1xf32>
    %233 = vector.extract_strided_slice %179 {offsets = [0, 128], sizes = [8, 16], strides = [1, 1]} : vector<8x144xf32> to vector<8x16xf32>
    %234 = vector.broadcast %232 : vector<8x1xf32> to vector<8x16xf32>
    %235 = arith.mulf %234, %233 : vector<8x16xf32>
    %236 = arith.addf %227, %231 : vector<8x16xf32>
    %237 = arith.addf %236, %235 : vector<8x16xf32>
    %238 = vector.extract_strided_slice %201 {offsets = [0, 0], sizes = [8, 1], strides = [1, 1]} : vector<8x3xf32> to vector<8x1xf32>
    %239 = vector.extract_strided_slice %179 {offsets = [0, 32], sizes = [8, 16], strides = [1, 1]} : vector<8x144xf32> to vector<8x16xf32>
    %240 = vector.broadcast %238 : vector<8x1xf32> to vector<8x16xf32>
    %241 = arith.mulf %240, %239 : vector<8x16xf32>
    %242 = vector.extract_strided_slice %201 {offsets = [0, 1], sizes = [8, 1], strides = [1, 1]} : vector<8x3xf32> to vector<8x1xf32>
    %243 = vector.extract_strided_slice %179 {offsets = [0, 48], sizes = [8, 16], strides = [1, 1]} : vector<8x144xf32> to vector<8x16xf32>
    %244 = vector.broadcast %242 : vector<8x1xf32> to vector<8x16xf32>
    %245 = arith.mulf %244, %243 : vector<8x16xf32>
    %246 = vector.extract_strided_slice %201 {offsets = [0, 2], sizes = [8, 1], strides = [1, 1]} : vector<8x3xf32> to vector<8x1xf32>
    %247 = vector.extract_strided_slice %179 {offsets = [0, 128], sizes = [8, 16], strides = [1, 1]} : vector<8x144xf32> to vector<8x16xf32>
    %248 = vector.broadcast %246 : vector<8x1xf32> to vector<8x16xf32>
    %249 = arith.mulf %248, %247 : vector<8x16xf32>
    %250 = arith.addf %241, %245 : vector<8x16xf32>
    %251 = arith.addf %250, %249 : vector<8x16xf32>
    %252 = vector.extract_strided_slice %212 {offsets = [0, 0], sizes = [8, 1], strides = [1, 1]} : vector<8x3xf32> to vector<8x1xf32>
    %253 = vector.extract_strided_slice %179 {offsets = [0, 64], sizes = [8, 16], strides = [1, 1]} : vector<8x144xf32> to vector<8x16xf32>
    %254 = vector.broadcast %252 : vector<8x1xf32> to vector<8x16xf32>
    %255 = arith.mulf %254, %253 : vector<8x16xf32>
    %256 = vector.extract_strided_slice %212 {offsets = [0, 1], sizes = [8, 1], strides = [1, 1]} : vector<8x3xf32> to vector<8x1xf32>
    %257 = vector.extract_strided_slice %179 {offsets = [0, 80], sizes = [8, 16], strides = [1, 1]} : vector<8x144xf32> to vector<8x16xf32>
    %258 = vector.broadcast %256 : vector<8x1xf32> to vector<8x16xf32>
    %259 = arith.mulf %258, %257 : vector<8x16xf32>
    %260 = vector.extract_strided_slice %212 {offsets = [0, 2], sizes = [8, 1], strides = [1, 1]} : vector<8x3xf32> to vector<8x1xf32>
    %261 = vector.extract_strided_slice %179 {offsets = [0, 128], sizes = [8, 16], strides = [1, 1]} : vector<8x144xf32> to vector<8x16xf32>
    %262 = vector.broadcast %260 : vector<8x1xf32> to vector<8x16xf32>
    %263 = arith.mulf %262, %261 : vector<8x16xf32>
    %264 = arith.addf %255, %259 : vector<8x16xf32>
    %265 = arith.addf %264, %263 : vector<8x16xf32>
    %266 = vector.extract_strided_slice %223 {offsets = [0, 0], sizes = [8, 1], strides = [1, 1]} : vector<8x3xf32> to vector<8x1xf32>
    %267 = vector.extract_strided_slice %179 {offsets = [0, 96], sizes = [8, 16], strides = [1, 1]} : vector<8x144xf32> to vector<8x16xf32>
    %268 = vector.broadcast %266 : vector<8x1xf32> to vector<8x16xf32>
    %269 = arith.mulf %268, %267 : vector<8x16xf32>
    %270 = vector.extract_strided_slice %223 {offsets = [0, 1], sizes = [8, 1], strides = [1, 1]} : vector<8x3xf32> to vector<8x1xf32>
    %271 = vector.extract_strided_slice %179 {offsets = [0, 112], sizes = [8, 16], strides = [1, 1]} : vector<8x144xf32> to vector<8x16xf32>
    %272 = vector.broadcast %270 : vector<8x1xf32> to vector<8x16xf32>
    %273 = arith.mulf %272, %271 : vector<8x16xf32>
    %274 = vector.extract_strided_slice %223 {offsets = [0, 2], sizes = [8, 1], strides = [1, 1]} : vector<8x3xf32> to vector<8x1xf32>
    %275 = vector.extract_strided_slice %179 {offsets = [0, 128], sizes = [8, 16], strides = [1, 1]} : vector<8x144xf32> to vector<8x16xf32>
    %276 = vector.broadcast %274 : vector<8x1xf32> to vector<8x16xf32>
    %277 = arith.mulf %276, %275 : vector<8x16xf32>
    %278 = arith.addf %269, %273 : vector<8x16xf32>
    %279 = arith.addf %278, %277 : vector<8x16xf32>
    %c0_38 = arith.constant 0 : index
    %c0_39 = arith.constant 0 : index
    %280 = vector.load %arg14[%c0_38, %c0_39] : memref<8x80xf32, #tpu.memory_space<vmem>>, vector<8x16xf32>
    tpu.vector_store %arg14[%c0_38, %c0_39], %237 {strides = array<i32>} : memref<8x80xf32, #tpu.memory_space<vmem>>, vector<8x16xf32>,
    %c0_40 = arith.constant 0 : index
    %c16_41 = arith.constant 16 : index
    %281 = vector.load %arg14[%c0_40, %c16_41] : memref<8x80xf32, #tpu.memory_space<vmem>>, vector<8x16xf32>
    tpu.vector_store %arg14[%c0_40, %c16_41], %251 {strides = array<i32>} : memref<8x80xf32, #tpu.memory_space<vmem>>, vector<8x16xf32>,
    %c0_42 = arith.constant 0 : index
    %c32_43 = arith.constant 32 : index
    %282 = vector.load %arg14[%c0_42, %c32_43] : memref<8x80xf32, #tpu.memory_space<vmem>>, vector<8x16xf32>
    tpu.vector_store %arg14[%c0_42, %c32_43], %265 {strides = array<i32>} : memref<8x80xf32, #tpu.memory_space<vmem>>, vector<8x16xf32>,
    %c0_44 = arith.constant 0 : index
    %c48_45 = arith.constant 48 : index
    %283 = vector.load %arg14[%c0_44, %c48_45] : memref<8x80xf32, #tpu.memory_space<vmem>>, vector<8x16xf32>
    tpu.vector_store %arg14[%c0_44, %c48_45], %279 {strides = array<i32>} : memref<8x80xf32, #tpu.memory_space<vmem>>, vector<8x16xf32>,
    %c0_46 = arith.constant 0 : index
    %c0_47 = arith.constant 0 : index
    %284 = vector.load %arg14[%c0_46, %c0_47] : memref<8x80xf32, #tpu.memory_space<vmem>>, vector<8x64xf32>
    %285 = arith.truncf %284 : vector<8x64xf32> to vector<8x64xbf16>
    %c0_48 = arith.constant 0 : index
    %c0_49 = arith.constant 0 : index
    %286 = vector.load %arg7[%c0_48, %c0_49] : memref<64x32xbf16, #tpu.memory_space<vmem>>, vector<64x32xbf16>
    %cst_50 = arith.constant dense<0.000000e+00> : vector<8x32xf32>
    %287 = tpu.matmul %285, %286, %cst_50 {dimension_numbers = #tpu.dot_dimension_numbers<[1], [0], [0], [1], [0, 0, 1, 1], [], []>} : vector<8x64xbf16>, vector<64x32xbf16>, vector<8x32xf32> -> vector<8x32xf32>
    %c0_51 = arith.constant 0 : index
    %c0_52 = arith.constant 0 : index
    %288 = vector.load %arg8[%c0_51, %c0_52] : memref<1x32xf32, #tpu.memory_space<vmem>>, vector<1x32xf32>
    %289 = vector.broadcast %288 : vector<1x32xf32> to vector<8x32xf32>
    %290 = arith.addf %287, %289 : vector<8x32xf32>
    %cst_53 = arith.constant 0.000000e+00 : f32
    %291 = vector.broadcast %cst_53 : f32 to vector<8x32xf32>
    %292 = arith.maximumf %290, %291 : vector<8x32xf32>
    %293 = arith.truncf %292 : vector<8x32xf32> to vector<8x32xbf16>
    %c0_54 = arith.constant 0 : index
    %c0_55 = arith.constant 0 : index
    %294 = vector.load %arg9[%c0_54, %c0_55] : memref<32x4xbf16, #tpu.memory_space<vmem>>, vector<32x4xbf16>
    %cst_56 = arith.constant dense<0.000000e+00> : vector<8x4xf32>
    %295 = tpu.matmul %293, %294, %cst_56 {dimension_numbers = #tpu.dot_dimension_numbers<[1], [0], [0], [1], [0, 0, 1, 1], [], []>} : vector<8x32xbf16>, vector<32x4xbf16>, vector<8x4xf32> -> vector<8x4xf32>
    %c0_57 = arith.constant 0 : index
    %c0_58 = arith.constant 0 : index
    %296 = vector.load %arg10[%c0_57, %c0_58] : memref<1x4xf32, #tpu.memory_space<vmem>>, vector<1x4xf32>
    %297 = vector.broadcast %296 : vector<1x4xf32> to vector<8x4xf32>
    %298 = arith.addf %295, %297 : vector<8x4xf32>
    %299 = arith.negf %298 : vector<8x4xf32>
    %300 = math.exp %299 : vector<8x4xf32>
    %cst_59 = arith.constant 1.000000e+00 : f32
    %301 = vector.broadcast %cst_59 : f32 to vector<8x4xf32>
    %302 = arith.addf %301, %300 : vector<8x4xf32>
    %303 = arith.divf %301, %302 : vector<8x4xf32>
    %c0_60 = arith.constant 0 : index
    %c0_61 = arith.constant 0 : index
    %304 = vector.load %arg2[%c0_60, %c0_61] : memref<8x2xf32, #tpu.memory_space<vmem>>, vector<8x2xf32>
    %c0_62 = arith.constant 0 : index
    %c0_63 = arith.constant 0 : index
    %305 = vector.load %arg11[%c0_62, %c0_63] : memref<2x4xf32, #tpu.memory_space<vmem>>, vector<2x4xf32>
    %cst_64 = arith.constant dense<0.000000e+00> : vector<8x4xf32>
    %306 = tpu.matmul %304, %305, %cst_64 {dimension_numbers = #tpu.dot_dimension_numbers<[1], [0], [0], [1], [0, 0, 1, 1], [], []>} : vector<8x2xf32>, vector<2x4xf32>, vector<8x4xf32> -> vector<8x4xf32>
    %307 = arith.mulf %303, %306 : vector<8x4xf32>
    %c0_65 = arith.constant 0 : index
    %c0_66 = arith.constant 0 : index
    %308 = vector.load %arg12[%c0_65, %c0_66] : memref<4x2xf32, #tpu.memory_space<vmem>>, vector<4x2xf32>
    %cst_67 = arith.constant dense<0.000000e+00> : vector<8x2xf32>
    %309 = tpu.matmul %307, %308, %cst_67 {dimension_numbers = #tpu.dot_dimension_numbers<[1], [0], [0], [1], [0, 0, 1, 1], [], []>} : vector<8x4xf32>, vector<4x2xf32>, vector<8x2xf32> -> vector<8x2xf32>
    %c0_68 = arith.constant 0 : index
    %c0_69 = arith.constant 0 : index
    %310 = vector.load %arg13[%c0_68, %c0_69] : memref<8x2xf32, #tpu.memory_space<vmem>>, vector<8x2xf32>
    tpu.vector_store %arg13[%c0_68, %c0_69], %309 {strides = array<i32>} : memref<8x2xf32, #tpu.memory_space<vmem>>, vector<8x2xf32>,
    return
  }
  func.func @transform_0(%arg0: i32) -> (i32, i32) {
    %c0_i32 = arith.constant 0 : i32
    %c0_i32_0 = arith.constant 0 : i32
    return %arg0, %c0_i32 : i32, i32
  }
  func.func @transform_1(%arg0: i32) -> (i32, i32) {
    %c0_i32 = arith.constant 0 : i32
    %c0_i32_0 = arith.constant 0 : i32
    return %arg0, %c0_i32 : i32, i32
  }
  func.func @transform_2(%arg0: i32) -> (i32, i32) {
    %c0_i32 = arith.constant 0 : i32
    %c0_i32_0 = arith.constant 0 : i32
    %c0_i32_1 = arith.constant 0 : i32
    return %c0_i32, %c0_i32_0 : i32, i32
  }
  func.func @transform_3(%arg0: i32) -> (i32, i32) {
    %c0_i32 = arith.constant 0 : i32
    %c0_i32_0 = arith.constant 0 : i32
    %c0_i32_1 = arith.constant 0 : i32
    return %c0_i32, %c0_i32_0 : i32, i32
  }
  func.func @transform_4(%arg0: i32) -> (i32, i32) {
    %c0_i32 = arith.constant 0 : i32
    %c0_i32_0 = arith.constant 0 : i32
    %c0_i32_1 = arith.constant 0 : i32
    return %c0_i32, %c0_i32_0 : i32, i32
  }
  func.func @transform_5(%arg0: i32) -> (i32, i32) {
    %c0_i32 = arith.constant 0 : i32
    %c0_i32_0 = arith.constant 0 : i32
    %c0_i32_1 = arith.constant 0 : i32
    return %c0_i32, %c0_i32_0 : i32, i32
  }
  func.func @transform_6(%arg0: i32) -> (i32, i32) {
    %c0_i32 = arith.constant 0 : i32
    %c0_i32_0 = arith.constant 0 : i32
    %c0_i32_1 = arith.constant 0 : i32
    return %c0_i32, %c0_i32_0 : i32, i32
  }
  func.func @transform_7(%arg0: i32) -> (i32, i32) {
    %c0_i32 = arith.constant 0 : i32
    %c0_i32_0 = arith.constant 0 : i32
    %c0_i32_1 = arith.constant 0 : i32
    return %c0_i32, %c0_i32_0 : i32, i32
  }
  func.func @transform_8(%arg0: i32) -> (i32, i32) {
    %c0_i32 = arith.constant 0 : i32
    %c0_i32_0 = arith.constant 0 : i32
    %c0_i32_1 = arith.constant 0 : i32
    return %c0_i32, %c0_i32_0 : i32, i32
  }
  func.func @transform_9(%arg0: i32) -> (i32, i32) {
    %c0_i32 = arith.constant 0 : i32
    %c0_i32_0 = arith.constant 0 : i32
    %c0_i32_1 = arith.constant 0 : i32
    return %c0_i32, %c0_i32_0 : i32, i32
  }
  func.func @transform_10(%arg0: i32) -> (i32, i32) {
    %c0_i32 = arith.constant 0 : i32
    %c0_i32_0 = arith.constant 0 : i32
    %c0_i32_1 = arith.constant 0 : i32
    return %c0_i32, %c0_i32_0 : i32, i32
  }
  func.func @transform_11(%arg0: i32) -> (i32, i32) {
    %c0_i32 = arith.constant 0 : i32
    %c0_i32_0 = arith.constant 0 : i32
    %c0_i32_1 = arith.constant 0 : i32
    return %c0_i32, %c0_i32_0 : i32, i32
  }
  func.func @transform_12(%arg0: i32) -> (i32, i32) {
    %c0_i32 = arith.constant 0 : i32
    %c0_i32_0 = arith.constant 0 : i32
    return %arg0, %c0_i32 : i32, i32
  }
}

</mosaic_0001>

<llo_original>
// kernel: ple_forward.1
$region0: #{ple_forward.1}
  #allocation0 [shape = 'u32[]', space=smem, size = 0x4, offset = 0x4, fixed_abs, tag = 'smem constant byte address 0x4 - core index']
  #allocation1 [shape = 'u32[72,128]{1,0:T(1,128)}', space=vmem, size = 0x9000, scoped, tag = 'internal scratch']
  #allocation2 [shape = 'f32[8,80]{1,0:T(8,128)}', space=vmem, size = 0x1000, scoped, tag = 'scratch operand']
  %s0 = inlined_call_operand.vmem [shape: f32[8,32], index: 0, kind: input, shape index: {}]
  %s1 = inlined_call_operand.vmem [shape: f32[8,2], index: 1, kind: input, shape index: {}]
  %s2 = inlined_call_operand.vmem [shape: bf16[32,165], index: 2, kind: input, shape index: {}]
  %s3 = inlined_call_operand.vmem [shape: f32[1,165], index: 3, kind: input, shape index: {}]
  %s4 = inlined_call_operand.vmem [shape: bf16[80,156], index: 4, kind: input, shape index: {}]
  %s5 = inlined_call_operand.vmem [shape: f32[1,156], index: 5, kind: input, shape index: {}]
  %s6 = inlined_call_operand.vmem [shape: bf16[64,32], index: 6, kind: input, shape index: {}]
  %s7 = inlined_call_operand.vmem [shape: f32[1,32], index: 7, kind: input, shape index: {}]
  %s8 = inlined_call_operand.vmem [shape: bf16[32,4], index: 8, kind: input, shape index: {}]
  %s9 = inlined_call_operand.vmem [shape: f32[1,4], index: 9, kind: input, shape index: {}]
  %s10 = inlined_call_operand.vmem [shape: f32[2,4], index: 10, kind: input, shape index: {}]
  %s11 = inlined_call_operand.vmem [shape: f32[4,2], index: 11, kind: input, shape index: {}]
  %s12 = inlined_call_operand.vmem [shape: f32[8,2], index: 12, kind: output, shape index: {}]
  %s13 = sld [smem:[#allocation0]]
  $region58: #{ple_forward.1} parent=0
    _
  %s15 = ssub.s32 1, %s13
  %s16 = scalar_select 0, %s15, %s13
  // Predicated region
  $region2: #{ple_forward.1} parent=0 // pred_check
    _
  $region3: #{ple_forward.1} parent=0 // pred_check_branch
    %18 = sbr.rel (0) target = $region5
  $region4: #{ple_forward.1} parent=0 // pred_region
    _
  $region5: #{ple_forward.1} parent=0 // pred_fallthru
    _
  // Predicated region
  $region6: #{ple_forward.1} parent=0 // pred_check
    _
  $region7: #{ple_forward.1} parent=0 // pred_check_branch
    %20 = sbr.rel (0) target = $region9
  $region8: #{ple_forward.1} parent=0 // pred_region
    _
  $region9: #{ple_forward.1} parent=0 // pred_fallthru
    _
  // Predicated region
  $region10: #{ple_forward.1} parent=0 // pred_check
    _
  $region11: #{ple_forward.1} parent=0 // pred_check_branch
    %22 = sbr.rel (0) target = $region13
  $region12: #{ple_forward.1} parent=0 // pred_region
    _
  $region13: #{ple_forward.1} parent=0 // pred_fallthru
    _
  // Predicated region
  $region14: #{ple_forward.1} parent=0 // pred_check
    _
  $region15: #{ple_forward.1} parent=0 // pred_check_branch
    %24 = sbr.rel (0) target = $region17
  $region16: #{ple_forward.1} parent=0 // pred_region
    _
  $region17: #{ple_forward.1} parent=0 // pred_fallthru
    _
  // Predicated region
  $region18: #{ple_forward.1} parent=0 // pred_check
    _
  $region19: #{ple_forward.1} parent=0 // pred_check_branch
    %26 = sbr.rel (0) target = $region21
  $region20: #{ple_forward.1} parent=0 // pred_region
    _
  $region21: #{ple_forward.1} parent=0 // pred_fallthru
    _
  // Predicated region
  $region22: #{ple_forward.1} parent=0 // pred_check
    _
  $region23: #{ple_forward.1} parent=0 // pred_check_branch
    %28 = sbr.rel (0) target = $region25
  $region24: #{ple_forward.1} parent=0 // pred_region
    _
  $region25: #{ple_forward.1} parent=0 // pred_fallthru
    _
  // Predicated region
  $region26: #{ple_forward.1} parent=0 // pred_check
    _
  $region27: #{ple_forward.1} parent=0 // pred_check_branch
    %30 = sbr.rel (0) target = $region29
  $region28: #{ple_forward.1} parent=0 // pred_region
    _
  $region29: #{ple_forward.1} parent=0 // pred_fallthru
    _
  // Predicated region
  $region30: #{ple_forward.1} parent=0 // pred_check
    _
  $region31: #{ple_forward.1} parent=0 // pred_check_branch
    %32 = sbr.rel (0) target = $region33
  $region32: #{ple_forward.1} parent=0 // pred_region
    _
  $region33: #{ple_forward.1} parent=0 // pred_fallthru
    _
  // Predicated region
  $region34: #{ple_forward.1} parent=0 // pred_check
    _
  $region35: #{ple_forward.1} parent=0 // pred_check_branch
    %34 = sbr.rel (0) target = $region37
  $region36: #{ple_forward.1} parent=0 // pred_region
    _
  $region37: #{ple_forward.1} parent=0 // pred_fallthru
    _
  // Predicated region
  $region38: #{ple_forward.1} parent=0 // pred_check
    _
  $region39: #{ple_forward.1} parent=0 // pred_check_branch
    %36 = sbr.rel (0) target = $region41
  $region40: #{ple_forward.1} parent=0 // pred_region
    _
  $region41: #{ple_forward.1} parent=0 // pred_fallthru
    _
  // Predicated region
  $region42: #{ple_forward.1} parent=0 // pred_check
    _
  $region43: #{ple_forward.1} parent=0 // pred_check_branch
    %38 = sbr.rel (0) target = $region45
  $region44: #{ple_forward.1} parent=0 // pred_region
    _
  $region45: #{ple_forward.1} parent=0 // pred_fallthru
    _
  // Predicated region
  $region46: #{ple_forward.1} parent=0 // pred_check
    _
  $region47: #{ple_forward.1} parent=0 // pred_check_branch
    %40 = sbr.rel (0) target = $region49
  $region48: #{ple_forward.1} parent=0 // pred_region
    _
  $region49: #{ple_forward.1} parent=0 // pred_fallthru
    _
  %v42 = vld [vmem:[%s0] sm:$0xff]
  %v43 = vpack.c.bf16 %v42, %v42
  %v44 = vld [vmem:[%s2] sm:$0xff]
  %v45 = vld [vmem:[%s2 + $0x8] sm:$0xff]
  %v46 = vld [vmem:[%s2 + $0x10] sm:$0xff]
  %v47 = vld [vmem:[%s2 + $0x18] sm:$0xff]
  %v48 = vld [vmem:[%s3] sm:$0x3]
  %v50 = vperm.slane %v48, 0
  %v51 = vperm.slane %v48, 1
  %v58 = vunpack.c.l.b16 %v44
  %v59 = vunpack.c.h.b16 %v44
  %v60 = vunpack.c.l.b16 %v45
  %v61 = vunpack.c.h.b16 %v45
  %v62 = vunpack.c.l.b16 %v46
  %v63 = vunpack.c.h.b16 %v46
  %v64 = vunpack.c.l.b16 %v47
  %v65 = vunpack.c.h.b16 %v47
  %v66 = vpack.c.b16 %v60, %v58
  %v67 = vpack.c.b16 %v61, %v59
  %v68 = vpack.c.b16 %v64, %v62
  %v69 = vpack.c.b16 %v65, %v63
  %vm74 = vcmask 261120
  %v76 = vsel %vm74, %v43, 0
  %78 = vmatpush.bf16.msra.mxu0 0
  %79 = vmatpush.bf16.msra.mxu0 0
  %80 = vmatpush.bf16.msra.mxu0 0
  %81 = vmatpush.bf16.msra.mxu0 0
  %82 = vmatpush.bf16.msra.mxu0 0
  %83 = vmatpush.bf16.msra.mxu0 0
  %84 = vmatpush.bf16.msra.mxu0 %v68
  %85 = vmatpush.bf16.msra.mxu0 %v66
  %86 = vmatmul.bf16.gmra.mxu0 %v76
  %v87 = vpop.f32.mrf.mxu0
  %v88 = vadd.f32 %v50, %v87
  %v89 = vpop.f32.mrf.mxu0
  %90 = vdwg.mxu0
  %91 = vmatpush.bf16.msra.mxu0 0
  %92 = vmatpush.bf16.msra.mxu0 0
  %93 = vmatpush.bf16.msra.mxu0 0
  %94 = vmatpush.bf16.msra.mxu0 0
  %95 = vmatpush.bf16.msra.mxu0 0
  %96 = vmatpush.bf16.msra.mxu0 0
  %97 = vmatpush.bf16.msra.mxu0 %v69
  %98 = vmatpush.bf16.msra.mxu0 %v67
  %99 = vmatmul.bf16.gmra.mxu0 %v76
  %v100 = vpop.f32.mrf.mxu0
  %v101 = vadd.f32 %v51, %v100
  %v102 = vpop.f32.mrf.mxu0
  %103 = vdwg.mxu0
  %v104 = vmax.f32 %v88, 0.0
  %v105 = vmax.f32 %v101, 0.0
  %vm106 = vcmask 154752
  %v107 = vsel %vm106, %v101, -inf
  %108 = vmax.xlane.f32.xlu0 %v107
  %v109 = vpop.xlane.xlu0 %108
  %v110 = vsub.f32 %v101, %v109
  %v111 = vmul.f32 %v110, 1.442695
  %v112 = vpow.pop %v111
  %114 = vrot.lane.b32.xlu0 %v112, 112
  %v115 = vpop.permute.xlu0 %114
  %vm117 = vcmask 23552
  %v118 = vsel %vm117, %v115, 0.0
  %119 = vadd.xlane.f32.xlu0 %v118
  %v120 = vpop.xlane.xlu0 %119
  %v121 = vrcp.pop %v120
  %v122 = vmul.f32 %v112, %v121
  %vm123 = vcmask 179352
  %v124 = vsel %vm123, %v101, -inf
  %125 = vmax.xlane.f32.xlu0 %v124
  %v126 = vpop.xlane.xlu0 %125
  %v127 = vsub.f32 %v101, %v126
  %v128 = vmul.f32 %v127, 1.442695
  %v129 = vpow.pop %v128
  %131 = vrot.lane.b32.xlu0 %v129, 109
  %v132 = vpop.permute.xlu0 %131
  %v134 = vsel %vm117, %v132, 0.0
  %135 = vadd.xlane.f32.xlu0 %v134
  %v136 = vpop.xlane.xlu0 %135
  %v137 = vrcp.pop %v136
  %v138 = vmul.f32 %v129, %v137
  %vm139 = vcmask 203952
  %v140 = vsel %vm139, %v101, -inf
  %141 = vmax.xlane.f32.xlu0 %v140
  %v142 = vpop.xlane.xlu0 %141
  %v143 = vsub.f32 %v101, %v142
  %v144 = vmul.f32 %v143, 1.442695
  %v145 = vpow.pop %v144
  %147 = vrot.lane.b32.xlu0 %v145, 106
  %v148 = vpop.permute.xlu0 %147
  %v150 = vsel %vm117, %v148, 0.0
  %151 = vadd.xlane.f32.xlu0 %v150
  %v152 = vpop.xlane.xlu0 %151
  %v153 = vrcp.pop %v152
  %v154 = vmul.f32 %v145, %v153
  %vm155 = vcmask 228552
  %v156 = vsel %vm155, %v101, -inf
  %157 = vmax.xlane.f32.xlu0 %v156
  %v158 = vpop.xlane.xlu0 %157
  %v159 = vsub.f32 %v101, %v158
  %v160 = vmul.f32 %v159, 1.442695
  %v161 = vpow.pop %v160
  %163 = vrot.lane.b32.xlu0 %v161, 103
  %v164 = vpop.permute.xlu0 %163
  %v166 = vsel %vm117, %v164, 0.0
  %167 = vadd.xlane.f32.xlu0 %v166
  %v168 = vpop.xlane.xlu0 %167
  %v169 = vrcp.pop %v168
  %v170 = vmul.f32 %v161, %v169
  %vm171 = vcmask 302304
  %v172 = vsel %vm171, %v101, -inf
  %173 = vmax.xlane.f32.xlu0 %v172
  %v174 = vpop.xlane.xlu0 %173
  %v175 = vsub.f32 %v101, %v174
  %v176 = vmul.f32 %v175, 1.442695
  %v177 = vpow.pop %v176
  %179 = vrot.lane.b32.xlu0 %v177, 100
  %v180 = vpop.permute.xlu0 %179
  %vm182 = vcmask 72704
  %v183 = vsel %vm182, %v180, 0.0
  %184 = vadd.xlane.f32.xlu0 %v183
  %v185 = vpop.xlane.xlu0 %184
  %v186 = vrcp.pop %v185
  %v187 = vmul.f32 %v177, %v186
  %189 = vset.pattern.permute.xlu0 16
  %190 = vperm.xlu0 %189, %v122
  %v191 = vpop.permute.xlu0 %190
  %v193 = vmul.f32 %v191, %v104
  %194 = vset.pattern.permute.xlu0 17
  %195 = vperm.xlu0 %194, %v122
  %v196 = vpop.permute.xlu0 %195
  %v198 = vmul.f32 %v196, %v104
  %199 = vset.pattern.permute.xlu0 18
  %200 = vperm.xlu0 %199, %v122
  %v201 = vpop.permute.xlu0 %200
  %v203 = vmul.f32 %v201, %v105
  %205 = vrot.lane.b32.xlu0 %v198, 112
  %v206 = vpop.permute.xlu0 %205
  %v208 = vadd.f32 %v193, %v206
  %v209 = vadd.f32 %v208, %v203
  %211 = vset.pattern.permute.xlu0 19
  %212 = vperm.xlu0 %211, %v138
  %v213 = vpop.permute.xlu0 %212
  %v215 = vmul.f32 %v213, %v104
  %216 = vset.pattern.permute.xlu0 20
  %217 = vperm.xlu0 %216, %v138
  %v218 = vpop.permute.xlu0 %217
  %v220 = vmul.f32 %v218, %v104
  %221 = vset.pattern.permute.xlu0 21
  %222 = vperm.xlu0 %221, %v138
  %v223 = vpop.permute.xlu0 %222
  %v225 = vmul.f32 %v223, %v105
  %227 = vrot.lane.b32.xlu0 %v220, 112
  %v228 = vpop.permute.xlu0 %227
  %v230 = vadd.f32 %v215, %v228
  %232 = vrot.lane.b32.xlu0 %v225, 32
  %v233 = vpop.permute.xlu0 %232
  %v235 = vadd.f32 %v230, %v233
  %237 = vset.pattern.permute.xlu0 22
  %238 = vperm.xlu0 %237, %v154
  %v239 = vpop.permute.xlu0 %238
  %v241 = vmul.f32 %v239, %v104
  %242 = vset.pattern.permute.xlu0 23
  %243 = vperm.xlu0 %242, %v154
  %v244 = vpop.permute.xlu0 %243
  %v246 = vmul.f32 %v244, %v104
  %247 = vset.pattern.permute.xlu0 24
  %248 = vperm.xlu0 %247, %v154
  %v249 = vpop.permute.xlu0 %248
  %v251 = vmul.f32 %v249, %v105
  %253 = vrot.lane.b32.xlu0 %v246, 112
  %v254 = vpop.permute.xlu0 %253
  %v256 = vadd.f32 %v241, %v254
  %258 = vrot.lane.b32.xlu0 %v251, 64
  %v259 = vpop.permute.xlu0 %258
  %v261 = vadd.f32 %v256, %v259
  %263 = vset.pattern.permute.xlu0 25
  %264 = vperm.xlu0 %263, %v170
  %v265 = vpop.permute.xlu0 %264
  %v267 = vmul.f32 %v265, %v104
  %268 = vset.pattern.permute.xlu0 26
  %269 = vperm.xlu0 %268, %v170
  %v270 = vpop.permute.xlu0 %269
  %v272 = vmul.f32 %v270, %v104
  %273 = vset.pattern.permute.xlu0 27
  %274 = vperm.xlu0 %273, %v170
  %v275 = vpop.permute.xlu0 %274
  %v277 = vmul.f32 %v275, %v105
  %279 = vrot.lane.b32.xlu0 %v272, 112
  %v280 = vpop.permute.xlu0 %279
  %v282 = vadd.f32 %v267, %v280
  %284 = vrot.lane.b32.xlu0 %v277, 96
  %v285 = vpop.permute.xlu0 %284
  %v287 = vadd.f32 %v282, %v285
  %289 = vset.pattern.permute.xlu0 28
  %290 = vperm.xlu0 %289, %v187
  %v291 = vpop.permute.xlu0 %290
  %v293 = vmul.f32 %v291, %v104
  %294 = vset.pattern.permute.xlu0 29
  %295 = vperm.xlu0 %294, %v187
  %v296 = vpop.permute.xlu0 %295
  %v298 = vmul.f32 %v296, %v104
  %299 = vset.pattern.permute.xlu0 30
  %300 = vperm.xlu0 %299, %v187
  %v301 = vpop.permute.xlu0 %300
  %v303 = vmul.f32 %v301, %v104
  %304 = vset.pattern.permute.xlu0 31
  %305 = vperm.xlu0 %304, %v187
  %v306 = vpop.permute.xlu0 %305
  %v308 = vmul.f32 %v306, %v104
  %309 = vset.pattern.permute.xlu0 32
  %310 = vperm.xlu0 %309, %v187
  %v311 = vpop.permute.xlu0 %310
  %v313 = vmul.f32 %v311, %v104
  %314 = vset.pattern.permute.xlu0 33
  %315 = vperm.xlu0 %314, %v187
  %v316 = vpop.permute.xlu0 %315
  %v318 = vmul.f32 %v316, %v104
  %319 = vset.pattern.permute.xlu0 34
  %320 = vperm.xlu0 %319, %v187
  %v321 = vpop.permute.xlu0 %320
  %v323 = vmul.f32 %v321, %v104
  %324 = vset.pattern.permute.xlu0 35
  %325 = vperm.xlu0 %324, %v187
  %v326 = vpop.permute.xlu0 %325
  %v328 = vmul.f32 %v326, %v104
  %329 = vset.pattern.permute.xlu0 36
  %330 = vperm.xlu0 %329, %v187
  %v331 = vpop.permute.xlu0 %330
  %v333 = vmul.f32 %v331, %v105
  %335 = vrot.lane.b32.xlu0 %v298, 112
  %v336 = vpop.permute.xlu0 %335
  %v338 = vadd.f32 %v293, %v336
  %340 = vrot.lane.b32.xlu0 %v308, 112
  %v341 = vpop.permute.xlu0 %340
  %v343 = vadd.f32 %v303, %v341
  %345 = vrot.lane.b32.xlu0 %v318, 112
  %v346 = vpop.permute.xlu0 %345
  %v348 = vadd.f32 %v313, %v346
  %350 = vrot.lane.b32.xlu0 %v328, 112
  %v351 = vpop.permute.xlu0 %350
  %v353 = vadd.f32 %v323, %v351
  %355 = vrot.lane.b32.xlu0 %v343, 96
  %v356 = vpop.permute.xlu0 %355
  %v358 = vadd.f32 %v338, %v356
  %360 = vrot.lane.b32.xlu0 %v353, 96
  %v361 = vpop.permute.xlu0 %360
  %v363 = vadd.f32 %v348, %v361
  %365 = vrot.lane.b32.xlu0 %v363, 64
  %v366 = vpop.permute.xlu0 %365
  %v368 = vadd.f32 %v358, %v366
  %v369 = vadd.f32 %v368, %v333
  %vm370 = vcmask 130048
  %371 = vst.msk [vmem:[#allocation2] sm:$0xff] %vm370, %v209
  %373 = vrot.lane.b32.xlu0 %v235, 112
  %v374 = vpop.permute.xlu0 %373
  %vm376 = vcmask 261248
  %377 = vst.msk [vmem:[#allocation2] sm:$0xff] %vm376, %v374
  %379 = vrot.lane.b32.xlu0 %v261, 96
  %v380 = vpop.permute.xlu0 %379
  %vm382 = vcmask 392448
  %383 = vst.msk [vmem:[#allocation2] sm:$0xff] %vm382, %v380
  %385 = vrot.lane.b32.xlu0 %v287, 80
  %v386 = vpop.permute.xlu0 %385
  %vm388 = vcmask 523648
  %389 = vst.msk [vmem:[#allocation2] sm:$0xff] %vm388, %v386
  %391 = vrot.lane.b32.xlu0 %v369, 64
  %v392 = vpop.permute.xlu0 %391
  %vm394 = vcmask 654848
  %395 = vst.msk [vmem:[#allocation2] sm:$0xff] %vm394, %v392
  %v396 = vld [vmem:[#allocation2] sm:$0xff]
  %v397 = vpack.c.bf16 %v396, %v396
  %v398 = vld [vmem:[%s4] sm:$0xff]
  %v399 = vld [vmem:[%s4 + $0x8] sm:$0xff]
  %v400 = vld [vmem:[%s4 + $0x10] sm:$0xff]
  %v401 = vld [vmem:[%s4 + $0x18] sm:$0xff]
  %v402 = vld [vmem:[%s4 + $0x20] sm:$0xff]
  %v403 = vld [vmem:[%s4 + $0x28] sm:$0xff]
  %v404 = vld [vmem:[%s4 + $0x30] sm:$0xff]
  %v405 = vld [vmem:[%s4 + $0x38] sm:$0xff]
  %v406 = vld [vmem:[%s4 + $0x40] sm:$0xff]
  %v407 = vld [vmem:[%s4 + $0x48] sm:$0xff]
  %v408 = vld [vmem:[%s5] sm:$0x3]
  %v410 = vperm.slane %v408, 0
  %v411 = vperm.slane %v408, 1
  %v424 = vunpack.c.l.b16 %v398
  %v425 = vunpack.c.h.b16 %v398
  %v426 = vunpack.c.l.b16 %v399
  %v427 = vunpack.c.h.b16 %v399
  %v428 = vunpack.c.l.b16 %v400
  %v429 = vunpack.c.h.b16 %v400
  %v430 = vunpack.c.l.b16 %v401
  %v431 = vunpack.c.h.b16 %v401
  %v432 = vunpack.c.l.b16 %v402
  %v433 = vunpack.c.h.b16 %v402
  %v434 = vunpack.c.l.b16 %v403
  %v435 = vunpack.c.h.b16 %v403
  %v436 = vunpack.c.l.b16 %v404
  %v437 = vunpack.c.h.b16 %v404
  %v438 = vunpack.c.l.b16 %v405
  %v439 = vunpack.c.h.b16 %v405
  %v440 = vunpack.c.l.b16 %v406
  %v441 = vunpack.c.h.b16 %v406
  %v442 = vunpack.c.l.b16 %v407
  %v443 = vunpack.c.h.b16 %v407
  %v444 = vpack.c.b16 %v426, %v424
  %v445 = vpack.c.b16 %v427, %v425
  %v446 = vpack.c.b16 %v430, %v428
  %v447 = vpack.c.b16 %v431, %v429
  %v448 = vpack.c.b16 %v434, %v432
  %v449 = vpack.c.b16 %v435, %v433
  %v450 = vpack.c.b16 %v438, %v436
  %v451 = vpack.c.b16 %v439, %v437
  %v452 = vpack.c.b16 %v442, %v440
  %v453 = vpack.c.b16 %v443, %v441
  %vm464 = vcmask 654336
  %v466 = vsel %vm464, %v397, 0
  %468 = vmatpush.bf16.msra.mxu0 0
  %469 = vmatpush.bf16.msra.mxu0 0
  %470 = vmatpush.bf16.msra.mxu0 0
  %471 = vmatpush.bf16.msra.mxu0 %v452
  %472 = vmatpush.bf16.msra.mxu0 %v450
  %473 = vmatpush.bf16.msra.mxu0 %v448
  %474 = vmatpush.bf16.msra.mxu0 %v446
  %475 = vmatpush.bf16.msra.mxu0 %v444
  %476 = vmatmul.bf16.gmra.mxu0 %v466
  %v477 = vpop.f32.mrf.mxu0
  %v478 = vadd.f32 %v410, %v477
  %v479 = vpop.f32.mrf.mxu0
  %480 = vdwg.mxu0
  %481 = vmatpush.bf16.msra.mxu0 0
  %482 = vmatpush.bf16.msra.mxu0 0
  %483 = vmatpush.bf16.msra.mxu0 0
  %484 = vmatpush.bf16.msra.mxu0 %v453
  %485 = vmatpush.bf16.msra.mxu0 %v451
  %486 = vmatpush.bf16.msra.mxu0 %v449
  %487 = vmatpush.bf16.msra.mxu0 %v447
  %488 = vmatpush.bf16.msra.mxu0 %v445
  %489 = vmatmul.bf16.gmra.mxu0 %v466
  %v490 = vpop.f32.mrf.mxu0
  %v491 = vadd.f32 %v411, %v490
  %v492 = vpop.f32.mrf.mxu0
  %493 = vdwg.mxu0
  %v494 = vmax.f32 %v478, 0.0
  %v495 = vmax.f32 %v491, 0.0
  %v496 = vsel %vm106, %v491, -inf
  %497 = vmax.xlane.f32.xlu0 %v496
  %v498 = vpop.xlane.xlu0 %497
  %v499 = vsub.f32 %v491, %v498
  %v500 = vmul.f32 %v499, 1.442695
  %v501 = vpow.pop %v500
  %503 = vrot.lane.b32.xlu0 %v501, 112
  %v504 = vpop.permute.xlu0 %503
  %v506 = vsel %vm117, %v504, 0.0
  %507 = vadd.xlane.f32.xlu0 %v506
  %v508 = vpop.xlane.xlu0 %507
  %v509 = vrcp.pop %v508
  %v510 = vmul.f32 %v501, %v509
  %v511 = vsel %vm123, %v491, -inf
  %512 = vmax.xlane.f32.xlu0 %v511
  %v513 = vpop.xlane.xlu0 %512
  %v514 = vsub.f32 %v491, %v513
  %v515 = vmul.f32 %v514, 1.442695
  %v516 = vpow.pop %v515
  %518 = vrot.lane.b32.xlu0 %v516, 109
  %v519 = vpop.permute.xlu0 %518
  %v521 = vsel %vm117, %v519, 0.0
  %522 = vadd.xlane.f32.xlu0 %v521
  %v523 = vpop.xlane.xlu0 %522
  %v524 = vrcp.pop %v523
  %v525 = vmul.f32 %v516, %v524
  %v526 = vsel %vm139, %v491, -inf
  %527 = vmax.xlane.f32.xlu0 %v526
  %v528 = vpop.xlane.xlu0 %527
  %v529 = vsub.f32 %v491, %v528
  %v530 = vmul.f32 %v529, 1.442695
  %v531 = vpow.pop %v530
  %533 = vrot.lane.b32.xlu0 %v531, 106
  %v534 = vpop.permute.xlu0 %533
  %v536 = vsel %vm117, %v534, 0.0
  %537 = vadd.xlane.f32.xlu0 %v536
  %v538 = vpop.xlane.xlu0 %537
  %v539 = vrcp.pop %v538
  %v540 = vmul.f32 %v531, %v539
  %v541 = vsel %vm155, %v491, -inf
  %542 = vmax.xlane.f32.xlu0 %v541
  %v543 = vpop.xlane.xlu0 %542
  %v544 = vsub.f32 %v491, %v543
  %v545 = vmul.f32 %v544, 1.442695
  %v546 = vpow.pop %v545
  %548 = vrot.lane.b32.xlu0 %v546, 103
  %v549 = vpop.permute.xlu0 %548
  %v551 = vsel %vm117, %v549, 0.0
  %552 = vadd.xlane.f32.xlu0 %v551
  %v553 = vpop.xlane.xlu0 %552
  %v554 = vrcp.pop %v553
  %v555 = vmul.f32 %v546, %v554
  %557 = vset.pattern.permute.xlu0 16
  %558 = vperm.xlu0 %557, %v510
  %v559 = vpop.permute.xlu0 %558
  %v561 = vmul.f32 %v559, %v494
  %562 = vset.pattern.permute.xlu0 17
  %563 = vperm.xlu0 %562, %v510
  %v564 = vpop.permute.xlu0 %563
  %v566 = vmul.f32 %v564, %v494
  %567 = vset.pattern.permute.xlu0 18
  %568 = vperm.xlu0 %567, %v510
  %v569 = vpop.permute.xlu0 %568
  %v571 = vmul.f32 %v569, %v495
  %573 = vrot.lane.b32.xlu0 %v566, 112
  %v574 = vpop.permute.xlu0 %573
  %v576 = vadd.f32 %v561, %v574
  %v577 = vadd.f32 %v576, %v571
  %579 = vset.pattern.permute.xlu0 19
  %580 = vperm.xlu0 %579, %v525
  %v581 = vpop.permute.xlu0 %580
  %v583 = vmul.f32 %v581, %v494
  %584 = vset.pattern.permute.xlu0 20
  %585 = vperm.xlu0 %584, %v525
  %v586 = vpop.permute.xlu0 %585
  %v588 = vmul.f32 %v586, %v494
  %589 = vset.pattern.permute.xlu0 21
  %590 = vperm.xlu0 %589, %v525
  %v591 = vpop.permute.xlu0 %590
  %v593 = vmul.f32 %v591, %v495
  %595 = vrot.lane.b32.xlu0 %v588, 112
  %v596 = vpop.permute.xlu0 %595
  %v598 = vadd.f32 %v583, %v596
  %600 = vrot.lane.b32.xlu0 %v593, 32
  %v601 = vpop.permute.xlu0 %600
  %v603 = vadd.f32 %v598, %v601
  %605 = vset.pattern.permute.xlu0 22
  %606 = vperm.xlu0 %605, %v540
  %v607 = vpop.permute.xlu0 %606
  %v609 = vmul.f32 %v607, %v494
  %610 = vset.pattern.permute.xlu0 23
  %611 = vperm.xlu0 %610, %v540
  %v612 = vpop.permute.xlu0 %611
  %v614 = vmul.f32 %v612, %v494
  %615 = vset.pattern.permute.xlu0 24
  %616 = vperm.xlu0 %615, %v540
  %v617 = vpop.permute.xlu0 %616
  %v619 = vmul.f32 %v617, %v495
  %621 = vrot.lane.b32.xlu0 %v614, 112
  %v622 = vpop.permute.xlu0 %621
  %v624 = vadd.f32 %v609, %v622
  %626 = vrot.lane.b32.xlu0 %v619, 64
  %v627 = vpop.permute.xlu0 %626
  %v629 = vadd.f32 %v624, %v627
  %631 = vset.pattern.permute.xlu0 25
  %632 = vperm.xlu0 %631, %v555
  %v633 = vpop.permute.xlu0 %632
  %v635 = vmul.f32 %v633, %v494
  %636 = vset.pattern.permute.xlu0 26
  %637 = vperm.xlu0 %636, %v555
  %v638 = vpop.permute.xlu0 %637
  %v640 = vmul.f32 %v638, %v494
  %641 = vset.pattern.permute.xlu0 27
  %642 = vperm.xlu0 %641, %v555
  %v643 = vpop.permute.xlu0 %642
  %v645 = vmul.f32 %v643, %v495
  %647 = vrot.lane.b32.xlu0 %v640, 112
  %v648 = vpop.permute.xlu0 %647
  %v650 = vadd.f32 %v635, %v648
  %652 = vrot.lane.b32.xlu0 %v645, 96
  %v653 = vpop.permute.xlu0 %652
  %v655 = vadd.f32 %v650, %v653
  %656 = vst.msk [vmem:[#allocation2] sm:$0xff] %vm370, %v577
  %658 = vrot.lane.b32.xlu0 %v603, 112
  %v659 = vpop.permute.xlu0 %658
  %661 = vst.msk [vmem:[#allocation2] sm:$0xff] %vm376, %v659
  %663 = vrot.lane.b32.xlu0 %v629, 96
  %v664 = vpop.permute.xlu0 %663
  %666 = vst.msk [vmem:[#allocation2] sm:$0xff] %vm382, %v664
  %668 = vrot.lane.b32.xlu0 %v655, 80
  %v669 = vpop.permute.xlu0 %668
  %671 = vst.msk [vmem:[#allocation2] sm:$0xff] %vm388, %v669
  %v672 = vld [vmem:[#allocation2] sm:$0xff]
  %v673 = vpack.c.bf16 %v672, %v672
  %v674 = vld [vmem:[%s6] sm:$0xf]
  %v675 = vld [vmem:[%s6 + $0x4] sm:$0xf]
  %v676 = vld [vmem:[%s6 + $0x8] sm:$0xf]
  %v677 = vld [vmem:[%s6 + $0xc] sm:$0xf]
  %v678 = vld [vmem:[%s6 + $0x10] sm:$0xf]
  %v679 = vld [vmem:[%s6 + $0x14] sm:$0xf]
  %v680 = vld [vmem:[%s6 + $0x18] sm:$0xf]
  %v681 = vld [vmem:[%s6 + $0x1c] sm:$0xf]
  %v682 = vld [vmem:[%s7] sm:$0x1]
  %v684 = vperm.slane %v682, 0
  %v694 = vunpack.c.l.b16 %v674
  %v695 = vunpack.c.l.b16 %v675
  %v696 = vunpack.c.l.b16 %v676
  %v697 = vunpack.c.l.b16 %v677
  %v698 = vunpack.c.l.b16 %v678
  %v699 = vunpack.c.l.b16 %v679
  %v700 = vunpack.c.l.b16 %v680
  %v701 = vunpack.c.l.b16 %v681
  %v702 = vpack.c.b16 %v695, %v694
  %v703 = vpack.c.b16 %v697, %v696
  %v704 = vpack.c.b16 %v699, %v698
  %v705 = vpack.c.b16 %v701, %v700
  %vm710 = vcmask 523264
  %v712 = vsel %vm710, %v673, 0
  %714 = vmatpush.bf16.msra.mxu0 0
  %715 = vmatpush.bf16.msra.mxu0 0
  %716 = vmatpush.bf16.msra.mxu0 0
  %717 = vmatpush.bf16.msra.mxu0 0
  %718 = vmatpush.bf16.msra.mxu0 %v705
  %719 = vmatpush.bf16.msra.mxu0 %v704
  %720 = vmatpush.bf16.msra.mxu0 %v703
  %721 = vmatpush.bf16.msra.mxu0 %v702
  %722 = vmatmul.bf16.gmra.mxu0 %v712
  %v723 = vpop.f32.mrf.mxu0
  %v724 = vadd.f32 %v684, %v723
  %v725 = vpop.f32.mrf.mxu0
  %726 = vdwg.mxu0
  %v727 = vmax.f32 %v724, 0.0
  %v728 = vpack.c.bf16 %v727, %v727
  %v729 = vld [vmem:[%s8] sm:$0xf]
  %v730 = vld [vmem:[%s8 + $0x4] sm:$0xf]
  %v731 = vld [vmem:[%s8 + $0x8] sm:$0xf]
  %v732 = vld [vmem:[%s8 + $0xc] sm:$0xf]
  %v733 = vld [vmem:[%s9] sm:$0x1]
  %v735 = vperm.slane %v733, 0
  %v741 = vunpack.c.l.b16 %v729
  %v742 = vunpack.c.l.b16 %v730
  %v743 = vunpack.c.l.b16 %v731
  %v744 = vunpack.c.l.b16 %v732
  %v745 = vpack.c.b16 %v742, %v741
  %v746 = vpack.c.b16 %v744, %v743
  %v750 = vsel %vm74, %v728, 0
  %752 = vmatpush.bf16.msra.mxu0 0
  %753 = vmatpush.bf16.msra.mxu0 0
  %754 = vmatpush.bf16.msra.mxu0 0
  %755 = vmatpush.bf16.msra.mxu0 0
  %756 = vmatpush.bf16.msra.mxu0 0
  %757 = vmatpush.bf16.msra.mxu0 0
  %758 = vmatpush.bf16.msra.mxu0 %v746
  %759 = vmatpush.bf16.msra.mxu0 %v745
  %760 = vmatmul.bf16.gmra.mxu0 %v750
  %v761 = vpop.f32.mrf.mxu0
  %v762 = vadd.f32 %v735, %v761
  %v763 = vpop.f32.mrf.mxu0
  %764 = vdwg.mxu0
  %v765 = vxor.u32 %v762, 2147483648
  %v766 = vmul.f32 %v765, 1.442695
  %v767 = vpow.pop %v766
  %v768 = vadd.f32 %v767, 1.0
  %v769 = vrcp.pop %v768
  %v770 = vmul.f32 %v768, %v769
  %v771 = vsub.f32 1.0, %v770
  %v772 = vmul.f32 %v769, %v771
  %v773 = vadd.f32 %v769, %v772
  %vm774 = vweird.f32 %v768
  %vm775 = vweird.f32 %v769
  %vm776 = vmor %vm774, %vm775
  %v777 = vsel %vm776, %v769, %v773
  %v778 = vand.u32 2147483647, %v768
  %vm779 = vcmp.eq.f32.partialorder %v778, 8.507059e+37
  %v780 = vand.u32 %v768, 2147483648
  %v781 = vor.u32 1.1754944e-38, %v780
  %v782 = vsel %vm779, %v781, %v777
  %v783 = vmul.f32 1.0, %v782
  %v784 = vld [vmem:[%s1] sm:$0xff]
  %v785 = vld [vmem:[%s10] sm:$0x3]
  %vm786 = vcmask 15360
  %v788 = vsel %vm786, %v784, 0
  %vm790 = vcmask 1041408
  %v792 = vsel %vm790, %v785, 0
  %794 = vmatpush.msra.mxu0 0.0
  %795 = vmatpush.msra.mxu0 0.0
  %796 = vmatpush.msra.mxu0 0.0
  %797 = vmatpush.msra.mxu0 0.0
  %798 = vmatpush.msra.mxu0 0.0
  %799 = vmatpush.msra.mxu0 0.0
  %800 = vmatpush.msra.mxu0 0.0
  %801 = vmatpush.msra.mxu0 0.0
  %802 = vmatpush.msra.mxu0 0.0
  %803 = vmatpush.msra.mxu0 0.0
  %804 = vmatpush.msra.mxu0 0.0
  %805 = vmatpush.msra.mxu0 0.0
  %806 = vmatpush.msra.mxu0 0.0
  %807 = vmatpush.msra.mxu0 0.0
  %808 = vmatpush.msra.mxu0 0.0
  %809 = vmatpush.msra.mxu0 %v792
  %810 = vmatmul.f32.gmra.mxu0 %v788
  %v811 = vpop.f32.mrf.mxu0
  %v812 = vadd.f32 0.0, %v811
  %813 = vdwg.mxu0
  %v814 = vmul.f32 %v783, %v812
  %v815 = vld [vmem:[%s11] sm:$0xf]
  %vm816 = vcmask 31744
  %v818 = vsel %vm816, %v814, 0
  %vm820 = vcmask 1043456
  %v822 = vsel %vm820, %v815, 0
  %824 = vmatpush.msra.mxu0 0.0
  %825 = vmatpush.msra.mxu0 0.0
  %826 = vmatpush.msra.mxu0 0.0
  %827 = vmatpush.msra.mxu0 0.0
  %828 = vmatpush.msra.mxu0 0.0
  %829 = vmatpush.msra.mxu0 0.0
  %830 = vmatpush.msra.mxu0 0.0
  %831 = vmatpush.msra.mxu0 0.0
  %832 = vmatpush.msra.mxu0 0.0
  %833 = vmatpush.msra.mxu0 0.0
  %834 = vmatpush.msra.mxu0 0.0
  %835 = vmatpush.msra.mxu0 0.0
  %836 = vmatpush.msra.mxu0 0.0
  %837 = vmatpush.msra.mxu0 0.0
  %838 = vmatpush.msra.mxu0 0.0
  %839 = vmatpush.msra.mxu0 %v822
  %840 = vmatmul.f32.gmra.mxu0 %v818
  %v841 = vpop.f32.mrf.mxu0
  %v842 = vadd.f32 0.0, %v841
  %843 = vdwg.mxu0
  %844 = vst.msk [vmem:[%s12] sm:$0xff] %vm786, %v842
  // Predicated region
  $region50: #{ple_forward.1} parent=0 // pred_check
    _
  $region51: #{ple_forward.1} parent=0 // pred_check_branch
    %846 = sbr.rel (0) target = $region53
  $region52: #{ple_forward.1} parent=0 // pred_region
    _
  $region53: #{ple_forward.1} parent=0 // pred_fallthru
    _
  // Predicated region
  $region54: #{ple_forward.1} parent=0 // pred_check
    _
  $region55: #{ple_forward.1} parent=0 // pred_check_branch
    %848 = sbr.rel (0) target = $region57
  $region56: #{ple_forward.1} parent=0 // pred_region
    _
  $region57: #{ple_forward.1} parent=0 // pred_fallthru
    _

</llo_original>
